<compile_context>
chip_gen: v7x
topology: tpu7x:2x2x1
jax: 0.10.0
libtpu: 0.0.40
codegen_flags: <defaults>
</compile_context>

<pallas_src>
import functools

import jax
import jax.numpy as jnp
from jax.experimental import pallas as pl
from jax.experimental.pallas import tpu as pltpu


# ----------------------------------------------------------------------------
# fused autoencoder kernel: one row-stacked block of batch elements per step
# ----------------------------------------------------------------------------
def _autoencoder_kernel(x_ref, w_in_ref, w_mid_ref, w_out_ref,
                        bq_ref, bs_ref, bh_ref, bz1_ref, bz2_ref, bo_ref,
                        o_ref, *, n_stack, t_rows):
    rows = x_ref.shape[0]                        # = n_stack * t_rows

    # Boundary masks for the roll-based one-row shifts (built once, reused by
    # every layer).  Row u belongs to stacked batch u // t_rows; shifts must
    # not leak across stacked-batch boundaries (this realizes the conv zero
    # padding of each individual sequence).
    ridx = jax.lax.broadcasted_iota(jnp.int32, (rows, 1), 0)
    dn_edge = ridx == 0
    up_edge = ridx == t_rows - 1
    for b in range(1, n_stack):
        dn_edge = jnp.logical_or(dn_edge, ridx == b * t_rows)
        up_edge = jnp.logical_or(up_edge, ridx == (b + 1) * t_rows - 1)
    dn_keep = jnp.where(dn_edge, 0.0, 1.0)       # (rows, 1) f32
    up_keep = jnp.where(up_edge, 0.0, 1.0)

    def sdn(v):                                  # v[u-1], zero at sequence start
        return pltpu.roll(v, shift=1, axis=0) * dn_keep

    def sup(v):                                  # v[u+1], zero at sequence end
        return pltpu.roll(v, shift=rows - 1, axis=0) * up_keep

    def mm(a, w):
        return jnp.dot(a, w, preferred_element_type=jnp.float32)

    def fused(act, wm, wd, wu, bias):            # one conv / convT layer
        return mm(act, wm) + mm(sdn(act), wd) + mm(sup(act), wu) + bias

    def relu(v):
        return jnp.maximum(v, 0.0)

    def wmid(i):                                 # i-th packed (64, 64) matrix
        return w_mid_ref[64 * i:64 * (i + 1), :]

    x = x_ref[...]                               # (rows, 8): 8 input phases

    # encoder: Conv1d(1,16) -> Conv1d(16,32) -> Conv1d(32,64), all k4 s2 p1
    q = relu(fused(x, w_in_ref[0:8, :], w_in_ref[8:16, :], w_in_ref[16:24, :],
                   bq_ref[...]))                                   # [q0|q1|q2|q3]
    s = relu(fused(q, wmid(0), wmid(1), wmid(2), bs_ref[...]))     # [s0|s1]
    h3 = relu(fused(s, wmid(3), wmid(4), wmid(5), bh_ref[...]))    # bottleneck
    # decoder: ConvT(64,32) -> ConvT(32,16) -> ConvT(16,1), all k4 s2 p1
    z1 = relu(fused(h3, wmid(6), wmid(7), wmid(8), bz1_ref[...]))  # [z1e|z1o]
    z2 = relu(fused(z1, wmid(9), wmid(10), wmid(11), bz2_ref[...]))  # [z2_0..3]
    o = fused(z2, w_out_ref[0:64, :], w_out_ref[64:128, :],
              w_out_ref[128:192, :], bo_ref[...])                  # (rows, 8)
    o_ref[...] = jax.nn.sigmoid(o).astype(o_ref.dtype)


# ----------------------------------------------------------------------------
# host-side weight repacking: PyTorch layouts -> merged polyphase matrices
# ----------------------------------------------------------------------------
def _prep_weights(params):
    f32 = jnp.float32
    w1, b1 = params["enc1_w"].astype(f32), params["enc1_b"].astype(f32)
    w2, b2 = params["enc2_w"].astype(f32), params["enc2_b"].astype(f32)
    w3, b3 = params["enc3_w"].astype(f32), params["enc3_b"].astype(f32)
    d1, c1 = params["dec1_w"].astype(f32), params["dec1_b"].astype(f32)
    d2, c2 = params["dec2_w"].astype(f32), params["dec2_b"].astype(f32)
    d3, c3 = params["dec3_w"].astype(f32), params["dec3_b"].astype(f32)

    # ---- enc1: Conv1d(1,16,k4,s2,p1).  q_r[u] = sum_k A_k x[8u+2r+k-1] -------
    A = jnp.transpose(w1[:, 0, :], (1, 0))                    # (4,16), A[k]=w1[:,0,k]
    e1m = jnp.zeros((8, 64), f32)
    e1m = e1m.at[0:3, 0:16].set(A[1:4])          # q0 <- A1,A2,A3 @ x[:,0:3]
    e1m = e1m.at[1:5, 16:32].set(A)              # q1 <- A0..A3   @ x[:,1:5]
    e1m = e1m.at[3:7, 32:48].set(A)              # q2 <- A0..A3   @ x[:,3:7]
    e1m = e1m.at[5:8, 48:64].set(A[0:3])         # q3 <- A0,A1,A2 @ x[:,5:8]
    e1d = jnp.zeros((8, 64), f32).at[7, 0:16].set(A[0])        # q0 <- A0 x[u-1,7]
    e1u = jnp.zeros((8, 64), f32).at[0, 48:64].set(A[3])       # q3 <- A3 x[u+1,0]
    w_in = jnp.concatenate([e1m, e1d, e1u], axis=0)            # (24, 64)

    # ---- enc2: Conv1d(16,32).  s0 = B0 q3[u-1]+B1 q0+B2 q1+B3 q2;
    #                            s1 = B0 q1 + B1 q2 + B2 q3 + B3 q0[u+1] -------
    Bt = jnp.transpose(w2, (2, 1, 0))                          # (4,16,32)
    e2m = jnp.zeros((64, 64), f32)
    e2m = e2m.at[0:16, 0:32].set(Bt[1]).at[16:32, 0:32].set(Bt[2])
    e2m = e2m.at[32:48, 0:32].set(Bt[3])
    e2m = e2m.at[16:32, 32:64].set(Bt[0]).at[32:48, 32:64].set(Bt[1])
    e2m = e2m.at[48:64, 32:64].set(Bt[2])
    e2d = jnp.zeros((64, 64), f32).at[48:64, 0:32].set(Bt[0])
    e2u = jnp.zeros((64, 64), f32).at[0:16, 32:64].set(Bt[3])

    # ---- enc3: Conv1d(32,64).  h3 = C0 s1[u-1]+C1 s0+C2 s1+C3 s0[u+1] --------
    Ct = jnp.transpose(w3, (2, 1, 0))                          # (4,32,64)
    e3m = jnp.zeros((64, 64), f32).at[0:32, :].set(Ct[1]).at[32:64, :].set(Ct[2])
    e3d = jnp.zeros((64, 64), f32).at[32:64, :].set(Ct[0])
    e3u = jnp.zeros((64, 64), f32).at[0:32, :].set(Ct[3])

    # ---- dec1: ConvT(64,32).  z1e = D1 h3 + D3 h3[u-1]; z1o = D2 h3 + D0 h3[u+1]
    Dt = jnp.transpose(d1, (2, 0, 1))                          # (4,64,32)
    zero32 = jnp.zeros((64, 32), f32)
    d1m = jnp.concatenate([Dt[1], Dt[2]], axis=1)              # [z1e | z1o]
    d1d = jnp.concatenate([Dt[3], zero32], axis=1)
    d1u = jnp.concatenate([zero32, Dt[0]], axis=1)

    # ---- dec2: ConvT(32,16).  z2_0 = E1 z1e + E3 z1o[u-1]; z2_1 = E0 z1o + E2 z1e;
    #                           z2_2 = E1 z1o + E3 z1e; z2_3 = E2 z1o + E0 z1e[u+1]
    Et = jnp.transpose(d2, (2, 0, 1))                          # (4,32,16)
    d2m = jnp.zeros((64, 64), f32)
    d2m = d2m.at[0:32, 0:16].set(Et[1])
    d2m = d2m.at[0:32, 16:32].set(Et[2]).at[32:64, 16:32].set(Et[0])
    d2m = d2m.at[0:32, 32:48].set(Et[3]).at[32:64, 32:48].set(Et[1])
    d2m = d2m.at[32:64, 48:64].set(Et[2])
    d2d = jnp.zeros((64, 64), f32).at[32:64, 0:16].set(Et[3])
    d2u = jnp.zeros((64, 64), f32).at[0:32, 48:64].set(Et[0])

    w_mid = jnp.concatenate([e2m, e2d, e2u, e3m, e3d, e3u,
                             d1m, d1d, d1u, d2m, d2d, d2u], axis=0)   # (768, 64)

    # ---- dec3: ConvT(16,1) + Sigmoid, 8 interleaved output phases ------------
    F = d3[:, 0, :]                                            # (16, 4)
    d3m = jnp.zeros((64, 8), f32)
    d3m = d3m.at[0:16, 0].set(F[:, 1])
    d3m = d3m.at[16:32, 1].set(F[:, 0]).at[0:16, 1].set(F[:, 2])
    d3m = d3m.at[16:32, 2].set(F[:, 1]).at[0:16, 2].set(F[:, 3])
    d3m = d3m.at[32:48, 3].set(F[:, 0]).at[16:32, 3].set(F[:, 2])
    d3m = d3m.at[32:48, 4].set(F[:, 1]).at[16:32, 4].set(F[:, 3])
    d3m = d3m.at[48:64, 5].set(F[:, 0]).at[32:48, 5].set(F[:, 2])
    d3m = d3m.at[48:64, 6].set(F[:, 1]).at[32:48, 6].set(F[:, 3])
    d3m = d3m.at[48:64, 7].set(F[:, 2])
    d3d = jnp.zeros((64, 8), f32).at[48:64, 0].set(F[:, 3])    # out0 <- F3 z2_3[u-1]
    d3u = jnp.zeros((64, 8), f32).at[0:16, 7].set(F[:, 0])     # out7 <- F0 z2_0[u+1]
    w_out = jnp.concatenate([d3m, d3d, d3u], axis=0)           # (192, 8)

    # ---- biases, one broadcastable row per layer ------------------------------
    b_q = jnp.tile(b1, 4).reshape(1, 64)
    b_s = jnp.tile(b2, 2).reshape(1, 64)
    b_h = b3.reshape(1, 64)
    b_z1 = jnp.tile(c1, 2).reshape(1, 64)
    b_z2 = jnp.tile(c2, 4).reshape(1, 64)
    b_o = jnp.tile(c3, 8).reshape(1, 8)

    return (w_in, w_mid, w_out, b_q, b_s, b_h, b_z1, b_z2, b_o)


# ----------------------------------------------------------------------------
# batch-stacking heuristic
# ----------------------------------------------------------------------------
def _pick_batch_block(batch, t_rows):
    """Stack a few batch elements per grid step (fewer sequential steps on
    v5e/v6e, bigger matmul M), keep >=2 grid steps when batch >= 2 (v7x
    megacore), and cap the live rows per step."""
    max_rows = 4096
    bb = min(8, max(1, max_rows // max(t_rows, 1)))
    if batch >= 2:
        bb = min(bb, batch // 2)
    bb = max(bb, 1)
    while batch % bb:
        bb -= 1
    return bb


# ----------------------------------------------------------------------------
# public wrapper
# ----------------------------------------------------------------------------
def conv1d_autoencoder(params, x, *, batch_block=None):
    """x: (B, 1, L) float32 with L % 8 == 0  ->  (B, 1, L)."""
    batch, cin, length = x.shape
    assert cin == 1 and length % 8 == 0
    t_rows = length // 8

    if batch_block is None:
        batch_block = _pick_batch_block(batch, t_rows)
    assert batch % batch_block == 0
    n_blocks = batch // batch_block
    rows = batch_block * t_rows

    packed = _prep_weights(params)
    x_blk = x.reshape(n_blocks, rows, 8)        # time-phase layout, row-stacked

    kernel = functools.partial(_autoencoder_kernel,
                               n_stack=batch_block, t_rows=t_rows)

    w_specs = [pl.BlockSpec(p.shape, lambda i: (0, 0)) for p in packed]
    weight_bytes = 4 * sum(int(p.size) for p in packed)
    flops = int(2 * (3 * 8 * 64 + 12 * 64 * 64 + 3 * 64 * 8) * batch * t_rows)

    out = pl.pallas_call(
        kernel,
        out_shape=jax.ShapeDtypeStruct((n_blocks, rows, 8), jnp.float32),
        grid=(n_blocks,),
        in_specs=[pl.BlockSpec((None, rows, 8), lambda i: (i, 0, 0))] + w_specs,
        out_specs=pl.BlockSpec((None, rows, 8), lambda i: (i, 0, 0)),
        compiler_params=pltpu.CompilerParams(
            dimension_semantics=("parallel",)),
        cost_estimate=pl.CostEstimate(
            flops=flops,
            transcendentals=int(batch * length),
            bytes_accessed=int(8 * batch * length + weight_bytes)),
    )(x_blk, *packed)

    return out.reshape(batch, 1, length)


# ----------------------------------------------------------------------------
# parameters (deterministic synthetic init, shapes from the nn.Module)
# ----------------------------------------------------------------------------
def init_params(key):
    def mk(key, shape, fan_in):
        bound = 1.0 / jnp.sqrt(fan_in)
        return jax.random.uniform(key, shape, jnp.float32, -bound, bound)

    keys = jax.random.split(key, 12)
    return {
        # encoder: Conv1d weights are (Cout, Cin, K)
        "enc1_w": mk(keys[0], (16, 1, 4), 1 * 4),   "enc1_b": mk(keys[1], (16,), 1 * 4),
        "enc2_w": mk(keys[2], (32, 16, 4), 16 * 4), "enc2_b": mk(keys[3], (32,), 16 * 4),
        "enc3_w": mk(keys[4], (64, 32, 4), 32 * 4), "enc3_b": mk(keys[5], (64,), 32 * 4),
        # decoder: ConvTranspose1d weights are (Cin, Cout, K)
        "dec1_w": mk(keys[6], (64, 32, 4), 64 * 4), "dec1_b": mk(keys[7], (32,), 64 * 4),
        "dec2_w": mk(keys[8], (32, 16, 4), 32 * 4), "dec2_b": mk(keys[9], (16,), 32 * 4),
        "dec3_w": mk(keys[10], (16, 1, 4), 16 * 4), "dec3_b": mk(keys[11], (1,), 16 * 4),
    }


# ----------------------------------------------------------------------------
# pure-XLA reference (lax convs) used only for a numerical check
# ----------------------------------------------------------------------------
def reference_forward(params, x):
    P = jax.lax.Precision.HIGHEST

    def conv(h, w, b):
        y = jax.lax.conv_general_dilated(
            h, w, window_strides=(2,), padding=[(1, 1)],
            dimension_numbers=("NCH", "OIH", "NCH"), precision=P)
        return y + b[None, :, None]

    def convT(h, w, b):
        w_conv = jnp.flip(w, axis=2).transpose(1, 0, 2)        # (Cout, Cin, K)
        y = jax.lax.conv_general_dilated(
            h, w_conv, window_strides=(1,), padding=[(2, 2)],
            lhs_dilation=(2,), dimension_numbers=("NCH", "OIH", "NCH"),
            precision=P)
        return y + b[None, :, None]

    h = jax.nn.relu(conv(x, params["enc1_w"], params["enc1_b"]))
    h = jax.nn.relu(conv(h, params["enc2_w"], params["enc2_b"]))
    h = jax.nn.relu(conv(h, params["enc3_w"], params["enc3_b"]))
    h = jax.nn.relu(convT(h, params["dec1_w"], params["dec1_b"]))
    h = jax.nn.relu(convT(h, params["dec2_w"], params["dec2_b"]))
    return jax.nn.sigmoid(convT(h, params["dec3_w"], params["dec3_b"]))


if __name__ == "__main__":
    key = jax.random.PRNGKey(0)
    pkey, xkey = jax.random.split(key)
    params = init_params(pkey)

    # main check: B=2, L=256 (T=32 rows/batch; rolls cross vreg sublane groups)
    batch, cin, length = 2, 1, 256
    x = jax.random.normal(xkey, (batch, cin, length), jnp.float32)

    fwd = jax.jit(conv1d_autoencoder)
    y = fwd(params, x)
    jax.block_until_ready(y)

    assert y.shape == (batch, cin, length), y.shape
    assert bool(jnp.all(jnp.isfinite(y)))
    assert bool(jnp.all((y >= 0.0) & (y <= 1.0)))      # sigmoid output range

    y_ref = jax.jit(reference_forward)(params, x)
    err = float(jnp.max(jnp.abs(y - y_ref)))
    assert err < 5e-4, f"mismatch vs XLA reference: {err}"

    # also exercise the row-stacked multi-batch path (batch_block > 1 masks)
    x2 = jax.random.normal(jax.random.fold_in(xkey, 1), (4, 1, 64), jnp.float32)
    fwd2 = jax.jit(functools.partial(conv1d_autoencoder, batch_block=2))
    y2 = fwd2(params, x2)
    jax.block_until_ready(y2)
    err2 = float(jnp.max(jnp.abs(y2 - jax.jit(reference_forward)(params, x2))))
    assert err2 < 5e-4, f"stacked-batch mismatch vs XLA reference: {err2}"

    print("KERNEL_OK")
</pallas_src>

<mosaic_0001>
module attributes {stable_mosaic.version = 11 : i64} {
  func.func @_autoencoder_kernel(%arg0: i32, %arg1: memref<1x32x8xf32, #tpu.memory_space<vmem>>, %arg2: memref<24x64xf32, #tpu.memory_space<vmem>>, %arg3: memref<768x64xf32, #tpu.memory_space<vmem>>, %arg4: memref<192x8xf32, #tpu.memory_space<vmem>>, %arg5: memref<1x64xf32, #tpu.memory_space<vmem>>, %arg6: memref<1x64xf32, #tpu.memory_space<vmem>>, %arg7: memref<1x64xf32, #tpu.memory_space<vmem>>, %arg8: memref<1x64xf32, #tpu.memory_space<vmem>>, %arg9: memref<1x64xf32, #tpu.memory_space<vmem>>, %arg10: memref<1x8xf32, #tpu.memory_space<vmem>>, %arg11: memref<1x32x8xf32, #tpu.memory_space<vmem>>) attributes {dimension_semantics = [#tpu.dimension_semantics<parallel>], iteration_bounds = array<i64: 2>, scalar_prefetch = 0 : i64, scratch_operands = 0 : i64, tpu.core_type = #tpu.core_type<tc>, window_params = [{transform_indices = @transform_0, window_bounds = array<i64: 1, 32, 8>}, {pipeline_mode = #tpu.pipeline_mode<synchronous>, transform_indices = @transform_1, window_bounds = array<i64: 24, 64>}, {pipeline_mode = #tpu.pipeline_mode<synchronous>, transform_indices = @transform_2, window_bounds = array<i64: 768, 64>}, {pipeline_mode = #tpu.pipeline_mode<synchronous>, transform_indices = @transform_3, window_bounds = array<i64: 192, 8>}, {pipeline_mode = #tpu.pipeline_mode<synchronous>, transform_indices = @transform_4, window_bounds = array<i64: 1, 64>}, {pipeline_mode = #tpu.pipeline_mode<synchronous>, transform_indices = @transform_5, window_bounds = array<i64: 1, 64>}, {pipeline_mode = #tpu.pipeline_mode<synchronous>, transform_indices = @transform_6, window_bounds = array<i64: 1, 64>}, {pipeline_mode = #tpu.pipeline_mode<synchronous>, transform_indices = @transform_7, window_bounds = array<i64: 1, 64>}, {pipeline_mode = #tpu.pipeline_mode<synchronous>, transform_indices = @transform_8, window_bounds = array<i64: 1, 64>}, {pipeline_mode = #tpu.pipeline_mode<synchronous>, transform_indices = @transform_9, window_bounds = array<i64: 1, 8>}, {transform_indices = @transform_10, window_bounds = array<i64: 1, 32, 8>}]} {
    %0 = tpu.iota {dimensions = array<i32: 0>} : vector<32x1xi32>
    %c0_i32 = arith.constant 0 : i32
    %1 = vector.broadcast %c0_i32 : i32 to vector<32x1xi32>
    %2 = arith.cmpi eq, %0, %1 : vector<32x1xi32>
    %c31_i32 = arith.constant 31 : i32
    %3 = vector.broadcast %c31_i32 : i32 to vector<32x1xi32>
    %4 = arith.cmpi eq, %0, %3 : vector<32x1xi32>
    %cst = arith.constant 0.000000e+00 : f32
    %cst_0 = arith.constant 1.000000e+00 : f32
    %5 = vector.broadcast %cst : f32 to vector<32x1xf32>
    %6 = vector.broadcast %cst_0 : f32 to vector<32x1xf32>
    %7 = arith.select %2, %5, %6 : vector<32x1xi1>, vector<32x1xf32>
    %cst_1 = arith.constant 0.000000e+00 : f32
    %cst_2 = arith.constant 1.000000e+00 : f32
    %8 = vector.broadcast %cst_1 : f32 to vector<32x1xf32>
    %9 = vector.broadcast %cst_2 : f32 to vector<32x1xf32>
    %10 = arith.select %4, %8, %9 : vector<32x1xi1>, vector<32x1xf32>
    %c0 = arith.constant 0 : index
    %c0_3 = arith.constant 0 : index
    %c0_4 = arith.constant 0 : index
    %11 = vector.load %arg1[%c0, %c0_3, %c0_4] : memref<1x32x8xf32, #tpu.memory_space<vmem>>, vector<1x32x8xf32>
    %12 = vector.shape_cast %11 : vector<1x32x8xf32> to vector<32x8xf32>
    %c0_5 = arith.constant 0 : index
    %c0_6 = arith.constant 0 : index
    %13 = vector.load %arg2[%c0_5, %c0_6] : memref<24x64xf32, #tpu.memory_space<vmem>>, vector<8x64xf32>
    %c8 = arith.constant 8 : index
    %c0_7 = arith.constant 0 : index
    %14 = vector.load %arg2[%c8, %c0_7] : memref<24x64xf32, #tpu.memory_space<vmem>>, vector<8x64xf32>
    %c16 = arith.constant 16 : index
    %c0_8 = arith.constant 0 : index
    %15 = vector.load %arg2[%c16, %c0_8] : memref<24x64xf32, #tpu.memory_space<vmem>>, vector<8x64xf32>
    %c0_9 = arith.constant 0 : index
    %c0_10 = arith.constant 0 : index
    %16 = vector.load %arg5[%c0_9, %c0_10] : memref<1x64xf32, #tpu.memory_space<vmem>>, vector<1x64xf32>
    %cst_11 = arith.constant dense<0.000000e+00> : vector<32x64xf32>
    %17 = tpu.matmul %12, %13, %cst_11 {dimension_numbers = #tpu.dot_dimension_numbers<[1], [0], [0], [1], [0, 0, 1, 1], [], []>} : vector<32x8xf32>, vector<8x64xf32>, vector<32x64xf32> -> vector<32x64xf32>
    %c1_i32 = arith.constant 1 : i32
    %18 = tpu.dynamic_rotate %12 by %c1_i32 dim 0 : vector<32x8xf32>, i32 -> vector<32x8xf32>
    %19 = vector.broadcast %7 : vector<32x1xf32> to vector<32x8xf32>
    %20 = arith.mulf %18, %19 : vector<32x8xf32>
    %cst_12 = arith.constant dense<0.000000e+00> : vector<32x64xf32>
    %21 = tpu.matmul %20, %14, %cst_12 {dimension_numbers = #tpu.dot_dimension_numbers<[1], [0], [0], [1], [0, 0, 1, 1], [], []>} : vector<32x8xf32>, vector<8x64xf32>, vector<32x64xf32> -> vector<32x64xf32>
    %22 = arith.addf %17, %21 : vector<32x64xf32>
    %c31_i32_13 = arith.constant 31 : i32
    %23 = tpu.dynamic_rotate %12 by %c31_i32_13 dim 0 : vector<32x8xf32>, i32 -> vector<32x8xf32>
    %24 = vector.broadcast %10 : vector<32x1xf32> to vector<32x8xf32>
    %25 = arith.mulf %23, %24 : vector<32x8xf32>
    %cst_14 = arith.constant dense<0.000000e+00> : vector<32x64xf32>
    %26 = tpu.matmul %25, %15, %cst_14 {dimension_numbers = #tpu.dot_dimension_numbers<[1], [0], [0], [1], [0, 0, 1, 1], [], []>} : vector<32x8xf32>, vector<8x64xf32>, vector<32x64xf32> -> vector<32x64xf32>
    %27 = arith.addf %22, %26 : vector<32x64xf32>
    %28 = vector.broadcast %16 : vector<1x64xf32> to vector<32x64xf32>
    %29 = arith.addf %27, %28 : vector<32x64xf32>
    %cst_15 = arith.constant 0.000000e+00 : f32
    %30 = vector.broadcast %cst_15 : f32 to vector<32x64xf32>
    %31 = arith.maximumf %29, %30 : vector<32x64xf32>
    %c0_16 = arith.constant 0 : index
    %c0_17 = arith.constant 0 : index
    %32 = vector.load %arg3[%c0_16, %c0_17] : memref<768x64xf32, #tpu.memory_space<vmem>>, vector<64x64xf32>
    %c64 = arith.constant 64 : index
    %c0_18 = arith.constant 0 : index
    %33 = vector.load %arg3[%c64, %c0_18] : memref<768x64xf32, #tpu.memory_space<vmem>>, vector<64x64xf32>
    %c128 = arith.constant 128 : index
    %c0_19 = arith.constant 0 : index
    %34 = vector.load %arg3[%c128, %c0_19] : memref<768x64xf32, #tpu.memory_space<vmem>>, vector<64x64xf32>
    %c0_20 = arith.constant 0 : index
    %c0_21 = arith.constant 0 : index
    %35 = vector.load %arg6[%c0_20, %c0_21] : memref<1x64xf32, #tpu.memory_space<vmem>>, vector<1x64xf32>
    %cst_22 = arith.constant dense<0.000000e+00> : vector<32x64xf32>
    %36 = tpu.matmul %31, %32, %cst_22 {dimension_numbers = #tpu.dot_dimension_numbers<[1], [0], [0], [1], [0, 0, 1, 1], [], []>} : vector<32x64xf32>, vector<64x64xf32>, vector<32x64xf32> -> vector<32x64xf32>
    %c1_i32_23 = arith.constant 1 : i32
    %37 = tpu.dynamic_rotate %31 by %c1_i32_23 dim 0 : vector<32x64xf32>, i32 -> vector<32x64xf32>
    %38 = vector.broadcast %7 : vector<32x1xf32> to vector<32x64xf32>
    %39 = arith.mulf %37, %38 : vector<32x64xf32>
    %cst_24 = arith.constant dense<0.000000e+00> : vector<32x64xf32>
    %40 = tpu.matmul %39, %33, %cst_24 {dimension_numbers = #tpu.dot_dimension_numbers<[1], [0], [0], [1], [0, 0, 1, 1], [], []>} : vector<32x64xf32>, vector<64x64xf32>, vector<32x64xf32> -> vector<32x64xf32>
    %41 = arith.addf %36, %40 : vector<32x64xf32>
    %c31_i32_25 = arith.constant 31 : i32
    %42 = tpu.dynamic_rotate %31 by %c31_i32_25 dim 0 : vector<32x64xf32>, i32 -> vector<32x64xf32>
    %43 = vector.broadcast %10 : vector<32x1xf32> to vector<32x64xf32>
    %44 = arith.mulf %42, %43 : vector<32x64xf32>
    %cst_26 = arith.constant dense<0.000000e+00> : vector<32x64xf32>
    %45 = tpu.matmul %44, %34, %cst_26 {dimension_numbers = #tpu.dot_dimension_numbers<[1], [0], [0], [1], [0, 0, 1, 1], [], []>} : vector<32x64xf32>, vector<64x64xf32>, vector<32x64xf32> -> vector<32x64xf32>
    %46 = arith.addf %41, %45 : vector<32x64xf32>
    %47 = vector.broadcast %35 : vector<1x64xf32> to vector<32x64xf32>
    %48 = arith.addf %46, %47 : vector<32x64xf32>
    %cst_27 = arith.constant 0.000000e+00 : f32
    %49 = vector.broadcast %cst_27 : f32 to vector<32x64xf32>
    %50 = arith.maximumf %48, %49 : vector<32x64xf32>
    %c192 = arith.constant 192 : index
    %c0_28 = arith.constant 0 : index
    %51 = vector.load %arg3[%c192, %c0_28] : memref<768x64xf32, #tpu.memory_space<vmem>>, vector<64x64xf32>
    %c256 = arith.constant 256 : index
    %c0_29 = arith.constant 0 : index
    %52 = vector.load %arg3[%c256, %c0_29] : memref<768x64xf32, #tpu.memory_space<vmem>>, vector<64x64xf32>
    %c320 = arith.constant 320 : index
    %c0_30 = arith.constant 0 : index
    %53 = vector.load %arg3[%c320, %c0_30] : memref<768x64xf32, #tpu.memory_space<vmem>>, vector<64x64xf32>
    %c0_31 = arith.constant 0 : index
    %c0_32 = arith.constant 0 : index
    %54 = vector.load %arg7[%c0_31, %c0_32] : memref<1x64xf32, #tpu.memory_space<vmem>>, vector<1x64xf32>
    %cst_33 = arith.constant dense<0.000000e+00> : vector<32x64xf32>
    %55 = tpu.matmul %50, %51, %cst_33 {dimension_numbers = #tpu.dot_dimension_numbers<[1], [0], [0], [1], [0, 0, 1, 1], [], []>} : vector<32x64xf32>, vector<64x64xf32>, vector<32x64xf32> -> vector<32x64xf32>
    %c1_i32_34 = arith.constant 1 : i32
    %56 = tpu.dynamic_rotate %50 by %c1_i32_34 dim 0 : vector<32x64xf32>, i32 -> vector<32x64xf32>
    %57 = vector.broadcast %7 : vector<32x1xf32> to vector<32x64xf32>
    %58 = arith.mulf %56, %57 : vector<32x64xf32>
    %cst_35 = arith.constant dense<0.000000e+00> : vector<32x64xf32>
    %59 = tpu.matmul %58, %52, %cst_35 {dimension_numbers = #tpu.dot_dimension_numbers<[1], [0], [0], [1], [0, 0, 1, 1], [], []>} : vector<32x64xf32>, vector<64x64xf32>, vector<32x64xf32> -> vector<32x64xf32>
    %60 = arith.addf %55, %59 : vector<32x64xf32>
    %c31_i32_36 = arith.constant 31 : i32
    %61 = tpu.dynamic_rotate %50 by %c31_i32_36 dim 0 : vector<32x64xf32>, i32 -> vector<32x64xf32>
    %62 = vector.broadcast %10 : vector<32x1xf32> to vector<32x64xf32>
    %63 = arith.mulf %61, %62 : vector<32x64xf32>
    %cst_37 = arith.constant dense<0.000000e+00> : vector<32x64xf32>
    %64 = tpu.matmul %63, %53, %cst_37 {dimension_numbers = #tpu.dot_dimension_numbers<[1], [0], [0], [1], [0, 0, 1, 1], [], []>} : vector<32x64xf32>, vector<64x64xf32>, vector<32x64xf32> -> vector<32x64xf32>
    %65 = arith.addf %60, %64 : vector<32x64xf32>
    %66 = vector.broadcast %54 : vector<1x64xf32> to vector<32x64xf32>
    %67 = arith.addf %65, %66 : vector<32x64xf32>
    %cst_38 = arith.constant 0.000000e+00 : f32
    %68 = vector.broadcast %cst_38 : f32 to vector<32x64xf32>
    %69 = arith.maximumf %67, %68 : vector<32x64xf32>
    %c384 = arith.constant 384 : index
    %c0_39 = arith.constant 0 : index
    %70 = vector.load %arg3[%c384, %c0_39] : memref<768x64xf32, #tpu.memory_space<vmem>>, vector<64x64xf32>
    %c448 = arith.constant 448 : index
    %c0_40 = arith.constant 0 : index
    %71 = vector.load %arg3[%c448, %c0_40] : memref<768x64xf32, #tpu.memory_space<vmem>>, vector<64x64xf32>
    %c512 = arith.constant 512 : index
    %c0_41 = arith.constant 0 : index
    %72 = vector.load %arg3[%c512, %c0_41] : memref<768x64xf32, #tpu.memory_space<vmem>>, vector<64x64xf32>
    %c0_42 = arith.constant 0 : index
    %c0_43 = arith.constant 0 : index
    %73 = vector.load %arg8[%c0_42, %c0_43] : memref<1x64xf32, #tpu.memory_space<vmem>>, vector<1x64xf32>
    %cst_44 = arith.constant dense<0.000000e+00> : vector<32x64xf32>
    %74 = tpu.matmul %69, %70, %cst_44 {dimension_numbers = #tpu.dot_dimension_numbers<[1], [0], [0], [1], [0, 0, 1, 1], [], []>} : vector<32x64xf32>, vector<64x64xf32>, vector<32x64xf32> -> vector<32x64xf32>
    %c1_i32_45 = arith.constant 1 : i32
    %75 = tpu.dynamic_rotate %69 by %c1_i32_45 dim 0 : vector<32x64xf32>, i32 -> vector<32x64xf32>
    %76 = vector.broadcast %7 : vector<32x1xf32> to vector<32x64xf32>
    %77 = arith.mulf %75, %76 : vector<32x64xf32>
    %cst_46 = arith.constant dense<0.000000e+00> : vector<32x64xf32>
    %78 = tpu.matmul %77, %71, %cst_46 {dimension_numbers = #tpu.dot_dimension_numbers<[1], [0], [0], [1], [0, 0, 1, 1], [], []>} : vector<32x64xf32>, vector<64x64xf32>, vector<32x64xf32> -> vector<32x64xf32>
    %79 = arith.addf %74, %78 : vector<32x64xf32>
    %c31_i32_47 = arith.constant 31 : i32
    %80 = tpu.dynamic_rotate %69 by %c31_i32_47 dim 0 : vector<32x64xf32>, i32 -> vector<32x64xf32>
    %81 = vector.broadcast %10 : vector<32x1xf32> to vector<32x64xf32>
    %82 = arith.mulf %80, %81 : vector<32x64xf32>
    %cst_48 = arith.constant dense<0.000000e+00> : vector<32x64xf32>
    %83 = tpu.matmul %82, %72, %cst_48 {dimension_numbers = #tpu.dot_dimension_numbers<[1], [0], [0], [1], [0, 0, 1, 1], [], []>} : vector<32x64xf32>, vector<64x64xf32>, vector<32x64xf32> -> vector<32x64xf32>
    %84 = arith.addf %79, %83 : vector<32x64xf32>
    %85 = vector.broadcast %73 : vector<1x64xf32> to vector<32x64xf32>
    %86 = arith.addf %84, %85 : vector<32x64xf32>
    %cst_49 = arith.constant 0.000000e+00 : f32
    %87 = vector.broadcast %cst_49 : f32 to vector<32x64xf32>
    %88 = arith.maximumf %86, %87 : vector<32x64xf32>
    %c576 = arith.constant 576 : index
    %c0_50 = arith.constant 0 : index
    %89 = vector.load %arg3[%c576, %c0_50] : memref<768x64xf32, #tpu.memory_space<vmem>>, vector<64x64xf32>
    %c640 = arith.constant 640 : index
    %c0_51 = arith.constant 0 : index
    %90 = vector.load %arg3[%c640, %c0_51] : memref<768x64xf32, #tpu.memory_space<vmem>>, vector<64x64xf32>
    %c704 = arith.constant 704 : index
    %c0_52 = arith.constant 0 : index
    %91 = vector.load %arg3[%c704, %c0_52] : memref<768x64xf32, #tpu.memory_space<vmem>>, vector<64x64xf32>
    %c0_53 = arith.constant 0 : index
    %c0_54 = arith.constant 0 : index
    %92 = vector.load %arg9[%c0_53, %c0_54] : memref<1x64xf32, #tpu.memory_space<vmem>>, vector<1x64xf32>
    %cst_55 = arith.constant dense<0.000000e+00> : vector<32x64xf32>
    %93 = tpu.matmul %88, %89, %cst_55 {dimension_numbers = #tpu.dot_dimension_numbers<[1], [0], [0], [1], [0, 0, 1, 1], [], []>} : vector<32x64xf32>, vector<64x64xf32>, vector<32x64xf32> -> vector<32x64xf32>
    %c1_i32_56 = arith.constant 1 : i32
    %94 = tpu.dynamic_rotate %88 by %c1_i32_56 dim 0 : vector<32x64xf32>, i32 -> vector<32x64xf32>
    %95 = vector.broadcast %7 : vector<32x1xf32> to vector<32x64xf32>
    %96 = arith.mulf %94, %95 : vector<32x64xf32>
    %cst_57 = arith.constant dense<0.000000e+00> : vector<32x64xf32>
    %97 = tpu.matmul %96, %90, %cst_57 {dimension_numbers = #tpu.dot_dimension_numbers<[1], [0], [0], [1], [0, 0, 1, 1], [], []>} : vector<32x64xf32>, vector<64x64xf32>, vector<32x64xf32> -> vector<32x64xf32>
    %98 = arith.addf %93, %97 : vector<32x64xf32>
    %c31_i32_58 = arith.constant 31 : i32
    %99 = tpu.dynamic_rotate %88 by %c31_i32_58 dim 0 : vector<32x64xf32>, i32 -> vector<32x64xf32>
    %100 = vector.broadcast %10 : vector<32x1xf32> to vector<32x64xf32>
    %101 = arith.mulf %99, %100 : vector<32x64xf32>
    %cst_59 = arith.constant dense<0.000000e+00> : vector<32x64xf32>
    %102 = tpu.matmul %101, %91, %cst_59 {dimension_numbers = #tpu.dot_dimension_numbers<[1], [0], [0], [1], [0, 0, 1, 1], [], []>} : vector<32x64xf32>, vector<64x64xf32>, vector<32x64xf32> -> vector<32x64xf32>
    %103 = arith.addf %98, %102 : vector<32x64xf32>
    %104 = vector.broadcast %92 : vector<1x64xf32> to vector<32x64xf32>
    %105 = arith.addf %103, %104 : vector<32x64xf32>
    %cst_60 = arith.constant 0.000000e+00 : f32
    %106 = vector.broadcast %cst_60 : f32 to vector<32x64xf32>
    %107 = arith.maximumf %105, %106 : vector<32x64xf32>
    %c0_61 = arith.constant 0 : index
    %c0_62 = arith.constant 0 : index
    %108 = vector.load %arg4[%c0_61, %c0_62] : memref<192x8xf32, #tpu.memory_space<vmem>>, vector<64x8xf32>
    %c64_63 = arith.constant 64 : index
    %c0_64 = arith.constant 0 : index
    %109 = vector.load %arg4[%c64_63, %c0_64] : memref<192x8xf32, #tpu.memory_space<vmem>>, vector<64x8xf32>
    %c128_65 = arith.constant 128 : index
    %c0_66 = arith.constant 0 : index
    %110 = vector.load %arg4[%c128_65, %c0_66] : memref<192x8xf32, #tpu.memory_space<vmem>>, vector<64x8xf32>
    %c0_67 = arith.constant 0 : index
    %c0_68 = arith.constant 0 : index
    %111 = vector.load %arg10[%c0_67, %c0_68] : memref<1x8xf32, #tpu.memory_space<vmem>>, vector<1x8xf32>
    %cst_69 = arith.constant dense<0.000000e+00> : vector<32x8xf32>
    %112 = tpu.matmul %107, %108, %cst_69 {dimension_numbers = #tpu.dot_dimension_numbers<[1], [0], [0], [1], [0, 0, 1, 1], [], []>} : vector<32x64xf32>, vector<64x8xf32>, vector<32x8xf32> -> vector<32x8xf32>
    %c1_i32_70 = arith.constant 1 : i32
    %113 = tpu.dynamic_rotate %107 by %c1_i32_70 dim 0 : vector<32x64xf32>, i32 -> vector<32x64xf32>
    %114 = vector.broadcast %7 : vector<32x1xf32> to vector<32x64xf32>
    %115 = arith.mulf %113, %114 : vector<32x64xf32>
    %cst_71 = arith.constant dense<0.000000e+00> : vector<32x8xf32>
    %116 = tpu.matmul %115, %109, %cst_71 {dimension_numbers = #tpu.dot_dimension_numbers<[1], [0], [0], [1], [0, 0, 1, 1], [], []>} : vector<32x64xf32>, vector<64x8xf32>, vector<32x8xf32> -> vector<32x8xf32>
    %117 = arith.addf %112, %116 : vector<32x8xf32>
    %c31_i32_72 = arith.constant 31 : i32
    %118 = tpu.dynamic_rotate %107 by %c31_i32_72 dim 0 : vector<32x64xf32>, i32 -> vector<32x64xf32>
    %119 = vector.broadcast %10 : vector<32x1xf32> to vector<32x64xf32>
    %120 = arith.mulf %118, %119 : vector<32x64xf32>
    %cst_73 = arith.constant dense<0.000000e+00> : vector<32x8xf32>
    %121 = tpu.matmul %120, %110, %cst_73 {dimension_numbers = #tpu.dot_dimension_numbers<[1], [0], [0], [1], [0, 0, 1, 1], [], []>} : vector<32x64xf32>, vector<64x8xf32>, vector<32x8xf32> -> vector<32x8xf32>
    %122 = arith.addf %117, %121 : vector<32x8xf32>
    %123 = vector.broadcast %111 : vector<1x8xf32> to vector<32x8xf32>
    %124 = arith.addf %122, %123 : vector<32x8xf32>
    %125 = arith.negf %124 : vector<32x8xf32>
    %126 = math.exp %125 : vector<32x8xf32>
    %cst_74 = arith.constant 1.000000e+00 : f32
    %127 = vector.broadcast %cst_74 : f32 to vector<32x8xf32>
    %128 = arith.addf %127, %126 : vector<32x8xf32>
    %129 = arith.divf %127, %128 : vector<32x8xf32>
    %c0_75 = arith.constant 0 : index
    %c0_76 = arith.constant 0 : index
    %c0_77 = arith.constant 0 : index
    %130 = vector.load %arg11[%c0_75, %c0_76, %c0_77] : memref<1x32x8xf32, #tpu.memory_space<vmem>>, vector<1x32x8xf32>
    %131 = vector.shape_cast %130 : vector<1x32x8xf32> to vector<32x8xf32>
    %132 = vector.shape_cast %129 : vector<32x8xf32> to vector<1x32x8xf32>
    tpu.vector_store %arg11[%c0_75, %c0_76, %c0_77], %132 {strides = array<i32>} : memref<1x32x8xf32, #tpu.memory_space<vmem>>, vector<1x32x8xf32>,
    return
  }
  func.func @transform_0(%arg0: i32) -> (i32, i32, i32) {
    %c0_i32 = arith.constant 0 : i32
    %c0_i32_0 = arith.constant 0 : i32
    %c0_i32_1 = arith.constant 0 : i32
    return %arg0, %c0_i32, %c0_i32_0 : i32, i32, i32
  }
  func.func @transform_1(%arg0: i32) -> (i32, i32) {
    %c0_i32 = arith.constant 0 : i32
    %c0_i32_0 = arith.constant 0 : i32
    %c0_i32_1 = arith.constant 0 : i32
    return %c0_i32, %c0_i32_0 : i32, i32
  }
  func.func @transform_2(%arg0: i32) -> (i32, i32) {
    %c0_i32 = arith.constant 0 : i32
    %c0_i32_0 = arith.constant 0 : i32
    %c0_i32_1 = arith.constant 0 : i32
    return %c0_i32, %c0_i32_0 : i32, i32
  }
  func.func @transform_3(%arg0: i32) -> (i32, i32) {
    %c0_i32 = arith.constant 0 : i32
    %c0_i32_0 = arith.constant 0 : i32
    %c0_i32_1 = arith.constant 0 : i32
    return %c0_i32, %c0_i32_0 : i32, i32
  }
  func.func @transform_4(%arg0: i32) -> (i32, i32) {
    %c0_i32 = arith.constant 0 : i32
    %c0_i32_0 = arith.constant 0 : i32
    %c0_i32_1 = arith.constant 0 : i32
    return %c0_i32, %c0_i32_0 : i32, i32
  }
  func.func @transform_5(%arg0: i32) -> (i32, i32) {
    %c0_i32 = arith.constant 0 : i32
    %c0_i32_0 = arith.constant 0 : i32
    %c0_i32_1 = arith.constant 0 : i32
    return %c0_i32, %c0_i32_0 : i32, i32
  }
  func.func @transform_6(%arg0: i32) -> (i32, i32) {
    %c0_i32 = arith.constant 0 : i32
    %c0_i32_0 = arith.constant 0 : i32
    %c0_i32_1 = arith.constant 0 : i32
    return %c0_i32, %c0_i32_0 : i32, i32
  }
  func.func @transform_7(%arg0: i32) -> (i32, i32) {
    %c0_i32 = arith.constant 0 : i32
    %c0_i32_0 = arith.constant 0 : i32
    %c0_i32_1 = arith.constant 0 : i32
    return %c0_i32, %c0_i32_0 : i32, i32
  }
  func.func @transform_8(%arg0: i32) -> (i32, i32) {
    %c0_i32 = arith.constant 0 : i32
    %c0_i32_0 = arith.constant 0 : i32
    %c0_i32_1 = arith.constant 0 : i32
    return %c0_i32, %c0_i32_0 : i32, i32
  }
  func.func @transform_9(%arg0: i32) -> (i32, i32) {
    %c0_i32 = arith.constant 0 : i32
    %c0_i32_0 = arith.constant 0 : i32
    %c0_i32_1 = arith.constant 0 : i32
    return %c0_i32, %c0_i32_0 : i32, i32
  }
  func.func @transform_10(%arg0: i32) -> (i32, i32, i32) {
    %c0_i32 = arith.constant 0 : i32
    %c0_i32_0 = arith.constant 0 : i32
    %c0_i32_1 = arith.constant 0 : i32
    return %arg0, %c0_i32, %c0_i32_0 : i32, i32, i32
  }
}

</mosaic_0001>

<llo_original>
// kernel: tile.28
$region0: #{tile.28}
  #allocation0 [shape = 's32[1]{0}', space=sflag, size = 0x4, scoped, tag = 'scoped memory for tile.28']
  %s0 = inlined_call_operand.vmem [shape: f32[16], index: 0, kind: input, shape index: {}]
  %s1 = inlined_call_operand.vmem [shape: f32[4,16], index: 1, kind: output, shape index: {}]
  // Predicated region
  $region2: #{tile.28} parent=0 // pred_check
    _
  $region3: #{tile.28} parent=0 // pred_check_branch
    %3 = sbr.rel (0) target = $region5
  $region4: #{tile.28} parent=0 // pred_region
    _
  $region5: #{tile.28} parent=0 // pred_fallthru
    _
  %v4 = vld [vmem:[%s0] ss:$0 sm:$0xff]
  %5 = vst [vmem:[%s1] sm:$0xf] %v4

// kernel: tile.29
$region0: #{tile.29}
  %s0 = inlined_call_operand.vmem [shape: f32[4,16], index: 0, kind: input, shape index: {}]
  %s1 = inlined_call_operand.vmem [shape: f32[1,64], index: 1, kind: output, shape index: {}]
  $region1: #{tile.29} parent=0
    #allocation0 [shape = 'u8[4096]{0}', space=vmem, size = 0x1000, scoped, tag = 'scoped mem for output reshape']
    #allocation1 [shape = 'u8[4096]{0}', space=vmem, size = 0x1000, scoped, tag = 'scoped mem for input reshape']
    %s3 = sshllo.u32 0, 4
    %v4 = vld [vmem:[%s0] sm:%s3]
    %5 = vst [vmem:[#allocation1] sm:%s3] %v4
    %v6 = vld [vmem:[#allocation1] sm:$0x1]
    %vm7 = vcmask 130048
    %8 = vst.msk [vmem:[#allocation0] sm:$0x1] %vm7, %v6
    %s9 = scalar_lea.vmem [#allocation1], 3
    %v10 = vld [vmem:[%s9] sm:$0x1]
    %11 = vrot.lane.b32.xlu0 %v10, 48
    %v12 = vpop.permute.xlu0 %11
    %vm13 = vcmask 523648
    %14 = vst.msk [vmem:[#allocation0] sm:$0x1] %vm13, %v12
    %s15 = scalar_lea.vmem [#allocation1], 2
    %v16 = vld [vmem:[%s15] sm:$0x1]
    %17 = vrot.lane.b32.xlu0 %v16, 32
    %v18 = vpop.permute.xlu0 %17
    %vm19 = vcmask 392448
    %20 = vst.msk [vmem:[#allocation0] sm:$0x1] %vm19, %v18
    %s21 = scalar_lea.vmem [#allocation1], 1
    %v22 = vld [vmem:[%s21] sm:$0x1]
    %23 = vrot.lane.b32.xlu0 %v22, 16
    %v24 = vpop.permute.xlu0 %23
    %vm25 = vcmask 261248
    %26 = vst.msk [vmem:[#allocation0] sm:$0x1] %vm25, %v24
    %s28 = sshllo.u32 0, 1
    %v30 = vld [vmem:[#allocation0] sm:%s28]
    %s31 = sshllo.u32 0, 1
    %32 = vst [vmem:[%s1] sm:%s31] %v30

// kernel: tile.33
$region0: #{tile.33}
  #allocation0 [shape = 's32[1]{0}', space=sflag, size = 0x4, scoped, tag = 'scoped memory for tile.33']
  %s0 = inlined_call_operand.vmem [shape: f32[32], index: 0, kind: input, shape index: {}]
  %s1 = inlined_call_operand.vmem [shape: f32[2,32], index: 1, kind: output, shape index: {}]
  // Predicated region
  $region2: #{tile.33} parent=0 // pred_check
    _
  $region3: #{tile.33} parent=0 // pred_check_branch
    %3 = sbr.rel (0) target = $region5
  $region4: #{tile.33} parent=0 // pred_region
    _
  $region5: #{tile.33} parent=0 // pred_fallthru
    _
  %v4 = vld [vmem:[%s0] ss:$0 sm:$0xff]
  %5 = vst [vmem:[%s1] sm:$0x3] %v4

// kernel: tile.34
$region0: #{tile.34}
  %s0 = inlined_call_operand.vmem [shape: f32[2,32], index: 0, kind: input, shape index: {}]
  %s1 = inlined_call_operand.vmem [shape: f32[1,64], index: 1, kind: output, shape index: {}]
  $region1: #{tile.34} parent=0
    #allocation0 [shape = 'u8[4096]{0}', space=vmem, size = 0x1000, scoped, tag = 'scoped mem for output reshape']
    #allocation1 [shape = 'u8[4096]{0}', space=vmem, size = 0x1000, scoped, tag = 'scoped mem for input reshape']
    %s3 = sshllo.u32 0, 2
    %v4 = vld [vmem:[%s0] sm:%s3]
    %5 = vst [vmem:[#allocation1] sm:%s3] %v4
    %v6 = vld [vmem:[#allocation1] sm:$0x1]
    %vm7 = vcmask 261120
    %8 = vst.msk [vmem:[#allocation0] sm:$0x1] %vm7, %v6
    %s9 = scalar_lea.vmem [#allocation1], 1
    %v10 = vld [vmem:[%s9] sm:$0x1]
    %11 = vrot.lane.b32.xlu0 %v10, 32
    %v12 = vpop.permute.xlu0 %11
    %vm13 = vcmask 523520
    %14 = vst.msk [vmem:[#allocation0] sm:$0x1] %vm13, %v12
    %s16 = sshllo.u32 0, 1
    %v18 = vld [vmem:[#allocation0] sm:%s16]
    %s19 = sshllo.u32 0, 1
    %20 = vst [vmem:[%s1] sm:%s19] %v18

// kernel: conv1d_autoencoder.1
$region0: #{conv1d_autoencoder.1}
  #allocation0 [shape = 'u32[]', space=smem, size = 0x4, offset = 0x4, fixed_abs, tag = 'smem constant byte address 0x4 - core index']
  #allocation1 [shape = 'u32[144,128]{1,0:T(1,128)}', space=vmem, size = 0x12000, scoped, tag = 'internal scratch']
  %s0 = inlined_call_operand.vmem [shape: f32[2,32,8], index: 0, kind: input, shape index: {}]
  %s1 = inlined_call_operand.vmem [shape: f32[24,64], index: 1, kind: input, shape index: {}]
  %s2 = inlined_call_operand.vmem [shape: f32[768,64], index: 2, kind: input, shape index: {}]
  %s3 = inlined_call_operand.vmem [shape: f32[192,8], index: 3, kind: input, shape index: {}]
  %s4 = inlined_call_operand.vmem [shape: f32[1,64], index: 4, kind: input, shape index: {}]
  %s5 = inlined_call_operand.vmem [shape: f32[1,64], index: 5, kind: input, shape index: {}]
  %s6 = inlined_call_operand.vmem [shape: f32[1,64], index: 6, kind: input, shape index: {}]
  %s7 = inlined_call_operand.vmem [shape: f32[1,64], index: 7, kind: input, shape index: {}]
  %s8 = inlined_call_operand.vmem [shape: f32[1,64], index: 8, kind: input, shape index: {}]
  %s9 = inlined_call_operand.vmem [shape: f32[1,8], index: 9, kind: input, shape index: {}]
  %s10 = inlined_call_operand.vmem [shape: f32[2,32,8], index: 10, kind: output, shape index: {}]
  %s11 = sld [smem:[#allocation0]]
  $region73: #{conv1d_autoencoder.1} parent=0
    _
  %s13 = ssub.s32 1, %s11
  %s14 = scalar_select 0, %s13, %s11
  loop: start=0, step=1, limit=4
  $region2: #{conv1d_autoencoder.1} parent=0 // loop_pre_header
    _
  $region3: #{conv1d_autoencoder.1} parent=0 // loop_header
    %s16 = sphi 0, %s20
    %p17 = scmp.ge.s32.totalorder %s16, 4
    %s26 = sphi 0, %s28
    %s29 = sphi 0, %s26
    %s30 = sphi 0, %s29
    %s46 = sphi 0, %s30
    %s50 = sphi 0, %s50
    %s52 = sphi 0, %s50
    %s53 = sphi 0, %s52
    %s67 = sphi 0, %s53
    %s71 = sphi 0, %s71
    %s73 = sphi 0, %s71
    %s74 = sphi 0, %s73
    %s88 = sphi 0, %s74
    %s92 = sphi 0, %s92
    %s94 = sphi 0, %s92
    %s95 = sphi 0, %s94
    %s109 = sphi 0, %s95
    %s113 = sphi 0, %s113
    %s115 = sphi 0, %s113
    %s116 = sphi 0, %s115
    %s130 = sphi 0, %s116
    %s134 = sphi 0, %s134
    %s136 = sphi 0, %s134
    %s137 = sphi 0, %s136
    %s151 = sphi 0, %s137
    %s155 = sphi 0, %s155
    %s157 = sphi 0, %s155
    %s158 = sphi 0, %s157
    %s172 = sphi 0, %s158
    %s176 = sphi 0, %s176
    %s178 = sphi 0, %s176
    %s179 = sphi 0, %s178
    %s193 = sphi 0, %s179
    %s197 = sphi 0, %s197
    %s199 = sphi 0, %s197
    %s200 = sphi 0, %s199
    %s214 = sphi 0, %s200
    %s218 = sphi 0, %s218
    %s220 = sphi 0, %s218
    %s221 = sphi 0, %s220
    %s235 = sphi 0, %s221
    %s241 = sphi 0, %s243
    %s244 = sphi 0, %s241
    %s245 = sphi 0, %s244
    %s261 = sphi 0, %s245
  $region4: #{conv1d_autoencoder.1} parent=0 // loop_header_branch
    %19 = sbr.rel (%p17) target = $region8
  $region5: #{conv1d_autoencoder.1} parent=0 // loop_body
    %s21 = ssub.s32 %s16, 1
    %s22 = ssub.s32 %s16, 2
    %s23 = sadd.s32 %s16, 1
    %s24 = ssub.s32 %s16, %s23
    %p25 = scmp.eq.s32.totalorder %s24, 0
    %s27 = sadd.s32 %s26, 1
    %s28 = scalar_select %p25, %s26, %s27
    %p31 = pneg %p25
    %p32 = scmp.eq.s32.totalorder %s16, 1
    %p33 = por %p31, %p32
    %p34 = scmp.ne.s32.totalorder %s26, %s29
    %p35 = scmp.eq.s32.totalorder %s16, 0
    %p36 = por %p34, %p35
    %p37 = scmp.ne.s32.totalorder %s26, %s29
    %p38 = scmp.eq.s32.totalorder %s21, 1
    %p39 = por %p37, %p38
    %p40 = scmp.ne.s32.totalorder %s29, %s30
    %p41 = scmp.eq.s32.totalorder %s21, 0
    %p42 = por %p40, %p41
    %p43 = scmp.ne.s32.totalorder %s29, %s30
    %p44 = scmp.eq.s32.totalorder %s22, 1
    %p45 = por %p43, %p44
    %p47 = scmp.ne.s32.totalorder %s30, %s46
    %p48 = scmp.eq.s32.totalorder %s22, 0
    %p49 = por %p47, %p48
    %s51 = sadd.s32 %s50, 1
    %p54 = scmp.eq.s32.totalorder %s16, 1
    %p55 = scmp.ne.s32.totalorder %s50, %s52
    %p56 = scmp.eq.s32.totalorder %s16, 0
    %p57 = por %p55, %p56
    %p58 = scmp.ne.s32.totalorder %s50, %s52
    %p59 = scmp.eq.s32.totalorder %s21, 1
    %p60 = por %p58, %p59
    %p61 = scmp.ne.s32.totalorder %s52, %s53
    %p62 = scmp.eq.s32.totalorder %s21, 0
    %p63 = por %p61, %p62
    %p64 = scmp.ne.s32.totalorder %s52, %s53
    %p65 = scmp.eq.s32.totalorder %s22, 1
    %p66 = por %p64, %p65
    %p68 = scmp.ne.s32.totalorder %s53, %s67
    %p69 = scmp.eq.s32.totalorder %s22, 0
    %p70 = por %p68, %p69
    %s72 = sadd.s32 %s71, 1
    %p75 = scmp.eq.s32.totalorder %s16, 1
    %p76 = scmp.ne.s32.totalorder %s71, %s73
    %p77 = scmp.eq.s32.totalorder %s16, 0
    %p78 = por %p76, %p77
    %p79 = scmp.ne.s32.totalorder %s71, %s73
    %p80 = scmp.eq.s32.totalorder %s21, 1
    %p81 = por %p79, %p80
    %p82 = scmp.ne.s32.totalorder %s73, %s74
    %p83 = scmp.eq.s32.totalorder %s21, 0
    %p84 = por %p82, %p83
    %p85 = scmp.ne.s32.totalorder %s73, %s74
    %p86 = scmp.eq.s32.totalorder %s22, 1
    %p87 = por %p85, %p86
    %p89 = scmp.ne.s32.totalorder %s74, %s88
    %p90 = scmp.eq.s32.totalorder %s22, 0
    %p91 = por %p89, %p90
    %s93 = sadd.s32 %s92, 1
    %p96 = scmp.eq.s32.totalorder %s16, 1
    %p97 = scmp.ne.s32.totalorder %s92, %s94
    %p98 = scmp.eq.s32.totalorder %s16, 0
    %p99 = por %p97, %p98
    %p100 = scmp.ne.s32.totalorder %s92, %s94
    %p101 = scmp.eq.s32.totalorder %s21, 1
    %p102 = por %p100, %p101
    %p103 = scmp.ne.s32.totalorder %s94, %s95
    %p104 = scmp.eq.s32.totalorder %s21, 0
    %p105 = por %p103, %p104
    %p106 = scmp.ne.s32.totalorder %s94, %s95
    %p107 = scmp.eq.s32.totalorder %s22, 1
    %p108 = por %p106, %p107
    %p110 = scmp.ne.s32.totalorder %s95, %s109
    %p111 = scmp.eq.s32.totalorder %s22, 0
    %p112 = por %p110, %p111
    %s114 = sadd.s32 %s113, 1
    %p117 = scmp.eq.s32.totalorder %s16, 1
    %p118 = scmp.ne.s32.totalorder %s113, %s115
    %p119 = scmp.eq.s32.totalorder %s16, 0
    %p120 = por %p118, %p119
    %p121 = scmp.ne.s32.totalorder %s113, %s115
    %p122 = scmp.eq.s32.totalorder %s21, 1
    %p123 = por %p121, %p122
    %p124 = scmp.ne.s32.totalorder %s115, %s116
    %p125 = scmp.eq.s32.totalorder %s21, 0
    %p126 = por %p124, %p125
    %p127 = scmp.ne.s32.totalorder %s115, %s116
    %p128 = scmp.eq.s32.totalorder %s22, 1
    %p129 = por %p127, %p128
    %p131 = scmp.ne.s32.totalorder %s116, %s130
    %p132 = scmp.eq.s32.totalorder %s22, 0
    %p133 = por %p131, %p132
    %s135 = sadd.s32 %s134, 1
    %p138 = scmp.eq.s32.totalorder %s16, 1
    %p139 = scmp.ne.s32.totalorder %s134, %s136
    %p140 = scmp.eq.s32.totalorder %s16, 0
    %p141 = por %p139, %p140
    %p142 = scmp.ne.s32.totalorder %s134, %s136
    %p143 = scmp.eq.s32.totalorder %s21, 1
    %p144 = por %p142, %p143
    %p145 = scmp.ne.s32.totalorder %s136, %s137
    %p146 = scmp.eq.s32.totalorder %s21, 0
    %p147 = por %p145, %p146
    %p148 = scmp.ne.s32.totalorder %s136, %s137
    %p149 = scmp.eq.s32.totalorder %s22, 1
    %p150 = por %p148, %p149
    %p152 = scmp.ne.s32.totalorder %s137, %s151
    %p153 = scmp.eq.s32.totalorder %s22, 0
    %p154 = por %p152, %p153
    %s156 = sadd.s32 %s155, 1
    %p159 = scmp.eq.s32.totalorder %s16, 1
    %p160 = scmp.ne.s32.totalorder %s155, %s157
    %p161 = scmp.eq.s32.totalorder %s16, 0
    %p162 = por %p160, %p161
    %p163 = scmp.ne.s32.totalorder %s155, %s157
    %p164 = scmp.eq.s32.totalorder %s21, 1
    %p165 = por %p163, %p164
    %p166 = scmp.ne.s32.totalorder %s157, %s158
    %p167 = scmp.eq.s32.totalorder %s21, 0
    %p168 = por %p166, %p167
    %p169 = scmp.ne.s32.totalorder %s157, %s158
    %p170 = scmp.eq.s32.totalorder %s22, 1
    %p171 = por %p169, %p170
    %p173 = scmp.ne.s32.totalorder %s158, %s172
    %p174 = scmp.eq.s32.totalorder %s22, 0
    %p175 = por %p173, %p174
    %s177 = sadd.s32 %s176, 1
    %p180 = scmp.eq.s32.totalorder %s16, 1
    %p181 = scmp.ne.s32.totalorder %s176, %s178
    %p182 = scmp.eq.s32.totalorder %s16, 0
    %p183 = por %p181, %p182
    %p184 = scmp.ne.s32.totalorder %s176, %s178
    %p185 = scmp.eq.s32.totalorder %s21, 1
    %p186 = por %p184, %p185
    %p187 = scmp.ne.s32.totalorder %s178, %s179
    %p188 = scmp.eq.s32.totalorder %s21, 0
    %p189 = por %p187, %p188
    %p190 = scmp.ne.s32.totalorder %s178, %s179
    %p191 = scmp.eq.s32.totalorder %s22, 1
    %p192 = por %p190, %p191
    %p194 = scmp.ne.s32.totalorder %s179, %s193
    %p195 = scmp.eq.s32.totalorder %s22, 0
    %p196 = por %p194, %p195
    %s198 = sadd.s32 %s197, 1
    %p201 = scmp.eq.s32.totalorder %s16, 1
    %p202 = scmp.ne.s32.totalorder %s197, %s199
    %p203 = scmp.eq.s32.totalorder %s16, 0
    %p204 = por %p202, %p203
    %p205 = scmp.ne.s32.totalorder %s197, %s199
    %p206 = scmp.eq.s32.totalorder %s21, 1
    %p207 = por %p205, %p206
    %p208 = scmp.ne.s32.totalorder %s199, %s200
    %p209 = scmp.eq.s32.totalorder %s21, 0
    %p210 = por %p208, %p209
    %p211 = scmp.ne.s32.totalorder %s199, %s200
    %p212 = scmp.eq.s32.totalorder %s22, 1
    %p213 = por %p211, %p212
    %p215 = scmp.ne.s32.totalorder %s200, %s214
    %p216 = scmp.eq.s32.totalorder %s22, 0
    %p217 = por %p215, %p216
    %s219 = sadd.s32 %s218, 1
    %p222 = scmp.eq.s32.totalorder %s16, 1
    %p223 = scmp.ne.s32.totalorder %s218, %s220
    %p224 = scmp.eq.s32.totalorder %s16, 0
    %p225 = por %p223, %p224
    %p226 = scmp.ne.s32.totalorder %s218, %s220
    %p227 = scmp.eq.s32.totalorder %s21, 1
    %p228 = por %p226, %p227
    %p229 = scmp.ne.s32.totalorder %s220, %s221
    %p230 = scmp.eq.s32.totalorder %s21, 0
    %p231 = por %p229, %p230
    %p232 = scmp.ne.s32.totalorder %s220, %s221
    %p233 = scmp.eq.s32.totalorder %s22, 1
    %p234 = por %p232, %p233
    %p236 = scmp.ne.s32.totalorder %s221, %s235
    %p237 = scmp.eq.s32.totalorder %s22, 0
    %p238 = por %p236, %p237
    %s239 = ssub.s32 %s16, %s23
    %p240 = scmp.eq.s32.totalorder %s239, 0
    %s242 = sadd.s32 %s241, 1
    %s243 = scalar_select %p240, %s241, %s242
    %p246 = pneg %p240
    %p247 = scmp.eq.s32.totalorder %s16, 1
    %p248 = por %p246, %p247
    %p249 = scmp.ne.s32.totalorder %s241, %s244
    %p250 = scmp.eq.s32.totalorder %s16, 0
    %p251 = por %p249, %p250
    %p252 = scmp.ne.s32.totalorder %s241, %s244
    %p253 = scmp.eq.s32.totalorder %s21, 1
    %p254 = por %p252, %p253
    %p255 = scmp.ne.s32.totalorder %s244, %s245
    %p256 = scmp.eq.s32.totalorder %s21, 0
    %p257 = por %p255, %p256
    %p258 = scmp.ne.s32.totalorder %s244, %s245
    %p259 = scmp.eq.s32.totalorder %s22, 1
    %p260 = por %p258, %p259
    %p262 = scmp.ne.s32.totalorder %s245, %s261
    %p263 = scmp.eq.s32.totalorder %s22, 0
    %p264 = por %p262, %p263
    %p265 = scmp.le.s32.totalorder 1, %s16
    %p266 = scmp.lt.s32.totalorder %s16, 3
    %p267 = pnand %p265, %p266
    %p268 = pneg %p267
    // Predicated region
    $region9: #{conv1d_autoencoder.1} parent=5 // pred_check
      _
    $region10: #{conv1d_autoencoder.1} parent=5 // pred_check_branch
      %270 = sbr.rel (%p267) target = $region12
    $region11: #{conv1d_autoencoder.1} parent=5 // pred_region
      %s271 = ssub.s32 %s16, 1
      // Predicated region
      $region13: #{conv1d_autoencoder.1} parent=11 // pred_check
        %p272 = pneg %p63
      $region14: #{conv1d_autoencoder.1} parent=11 // pred_check_branch
        %274 = sbr.rel (%p272) target = $region16
      $region15: #{conv1d_autoencoder.1} parent=11 // pred_region
        _
      $region16: #{conv1d_autoencoder.1} parent=11 // pred_fallthru
        _
      // Predicated region
      $region17: #{conv1d_autoencoder.1} parent=11 // pred_check
        %p275 = pneg %p84
      $region18: #{conv1d_autoencoder.1} parent=11 // pred_check_branch
        %277 = sbr.rel (%p275) target = $region20
      $region19: #{conv1d_autoencoder.1} parent=11 // pred_region
        _
      $region20: #{conv1d_autoencoder.1} parent=11 // pred_fallthru
        _
      // Predicated region
      $region21: #{conv1d_autoencoder.1} parent=11 // pred_check
        %p278 = pneg %p105
      $region22: #{conv1d_autoencoder.1} parent=11 // pred_check_branch
        %280 = sbr.rel (%p278) target = $region24
      $region23: #{conv1d_autoencoder.1} parent=11 // pred_region
        _
      $region24: #{conv1d_autoencoder.1} parent=11 // pred_fallthru
        _
      // Predicated region
      $region25: #{conv1d_autoencoder.1} parent=11 // pred_check
        %p281 = pneg %p126
      $region26: #{conv1d_autoencoder.1} parent=11 // pred_check_branch
        %283 = sbr.rel (%p281) target = $region28
      $region27: #{conv1d_autoencoder.1} parent=11 // pred_region
        _
      $region28: #{conv1d_autoencoder.1} parent=11 // pred_fallthru
        _
      // Predicated region
      $region29: #{conv1d_autoencoder.1} parent=11 // pred_check
        %p284 = pneg %p147
      $region30: #{conv1d_autoencoder.1} parent=11 // pred_check_branch
        %286 = sbr.rel (%p284) target = $region32
      $region31: #{conv1d_autoencoder.1} parent=11 // pred_region
        _
      $region32: #{conv1d_autoencoder.1} parent=11 // pred_fallthru
        _
      // Predicated region
      $region33: #{conv1d_autoencoder.1} parent=11 // pred_check
        %p287 = pneg %p168
      $region34: #{conv1d_autoencoder.1} parent=11 // pred_check_branch
        %289 = sbr.rel (%p287) target = $region36
      $region35: #{conv1d_autoencoder.1} parent=11 // pred_region
        _
      $region36: #{conv1d_autoencoder.1} parent=11 // pred_fallthru
        _
      // Predicated region
      $region37: #{conv1d_autoencoder.1} parent=11 // pred_check
        %p290 = pneg %p189
      $region38: #{conv1d_autoencoder.1} parent=11 // pred_check_branch
        %292 = sbr.rel (%p290) target = $region40
      $region39: #{conv1d_autoencoder.1} parent=11 // pred_region
        _
      $region40: #{conv1d_autoencoder.1} parent=11 // pred_fallthru
        _
      // Predicated region
      $region41: #{conv1d_autoencoder.1} parent=11 // pred_check
        %p293 = pneg %p210
      $region42: #{conv1d_autoencoder.1} parent=11 // pred_check_branch
        %295 = sbr.rel (%p293) target = $region44
      $region43: #{conv1d_autoencoder.1} parent=11 // pred_region
        _
      $region44: #{conv1d_autoencoder.1} parent=11 // pred_fallthru
        _
      // Predicated region
      $region45: #{conv1d_autoencoder.1} parent=11 // pred_check
        %p296 = pneg %p231
      $region46: #{conv1d_autoencoder.1} parent=11 // pred_check_branch
        %298 = sbr.rel (%p296) target = $region48
      $region47: #{conv1d_autoencoder.1} parent=11 // pred_region
        _
      $region48: #{conv1d_autoencoder.1} parent=11 // pred_fallthru
        _
    $region12: #{conv1d_autoencoder.1} parent=5 // pred_fallthru
      _
    %p299 = scmp.lt.s32.totalorder %s16, 2
    // Predicated region
    $region49: #{conv1d_autoencoder.1} parent=5 // pred_check
      %p300 = pneg %p299
    $region50: #{conv1d_autoencoder.1} parent=5 // pred_check_branch
      %302 = sbr.rel (%p300) target = $region52
    $region51: #{conv1d_autoencoder.1} parent=5 // pred_region
      // Predicated region
      $region53: #{conv1d_autoencoder.1} parent=51 // pred_check
        %p303 = pneg %p36
      $region54: #{conv1d_autoencoder.1} parent=51 // pred_check_branch
        %305 = sbr.rel (%p303) target = $region56
      $region55: #{conv1d_autoencoder.1} parent=51 // pred_region
        %p306 = scmp.lt.s32.totalorder %s16, 1
        %s307 = scalar_select %p306, %s16, 1
        %s308 = smul.addr %s307, 4
        %s309 = smul.addr %s308, 8
        %s310 = scalar_lea.vmem %s0, %s309
      $region56: #{conv1d_autoencoder.1} parent=51 // pred_fallthru
        _
    $region52: #{conv1d_autoencoder.1} parent=5 // pred_fallthru
      _
    %p311 = scmp.le.s32.totalorder 1, %s16
    %p312 = scmp.lt.s32.totalorder %s16, 3
    %p313 = pnand %p311, %p312
    %p314 = pneg %p313
    // Predicated region
    $region57: #{conv1d_autoencoder.1} parent=5 // pred_check
      _
    $region58: #{conv1d_autoencoder.1} parent=5 // pred_check_branch
      %316 = sbr.rel (%p313) target = $region60
    $region59: #{conv1d_autoencoder.1} parent=5 // pred_region
      %s317 = ssub.s32 %s16, 1
      %p318 = scmp.lt.s32.totalorder %s21, 1
      %s319 = scalar_select %p318, %s21, 1
      %s320 = smul.addr %s319, 4
      %s321 = smul.addr %s320, 8
      %s322 = scalar_lea.vmem %s0, %s321
      %p323 = pneg %p42
      %p324 = pneg %p39
      %p325 = pneg %p63
      %p326 = pneg %p60
      %p327 = pneg %p84
      %p328 = pneg %p81
      %p329 = pneg %p105
      %p330 = pneg %p102
      %p331 = pneg %p126
      %p332 = pneg %p123
      %p333 = pneg %p147
      %p334 = pneg %p144
      %p335 = pneg %p168
      %p336 = pneg %p165
      %p337 = pneg %p189
      %p338 = pneg %p186
      %p339 = pneg %p210
      %p340 = pneg %p207
      %p341 = pneg %p231
      %p342 = pneg %p228
      %p343 = pneg %p257
      %p344 = pneg %p254
      %p345 = scmp.lt.s32.totalorder %s21, 1
      %s346 = scalar_select %p345, %s21, 1
      %s347 = smul.addr %s346, 4
      %s348 = smul.addr %s347, 8
      %s349 = scalar_lea.vmem %s10, %s348
      %p350 = scmp.lt.s32.totalorder %s21, 1
      %s351 = scalar_select %p350, %s21, 1
      %s352 = smul.addr %s351, 4
      %s353 = smul.addr %s352, 8
      %s354 = scalar_lea.vmem %s0, %s353
      %p355 = scmp.lt.s32.totalorder %s21, 1
      %s356 = scalar_select %p355, %s21, 1
      %s357 = smul.addr %s356, 4
      %s358 = smul.addr %s357, 8
      %s359 = scalar_lea.vmem %s10, %s358
      %v360 = vlaneseq
      %v361 = vshrl.u32 %v360, 7
      %v362 = vadd.s32 %v361, 8
      %v363 = vadd.s32 %v361, 16
      %v364 = vadd.s32 %v361, 24
      %vm365 = vcmp.eq.s32.totalorder %v361, 0
      %vm366 = vcmp.eq.s32.totalorder %v362, 0
      %vm367 = vcmp.eq.s32.totalorder %v363, 0
      %vm368 = vcmp.eq.s32.totalorder %v364, 0
      %vm369 = vcmp.eq.s32.totalorder %v361, 31
      %vm370 = vcmp.eq.s32.totalorder %v362, 31
      %vm371 = vcmp.eq.s32.totalorder %v363, 31
      %vm372 = vcmp.eq.s32.totalorder %v364, 31
      %v373 = vsel %vm365, 0.0, 1.0
      %v374 = vsel %vm366, 0.0, 1.0
      %v375 = vsel %vm367, 0.0, 1.0
      %v376 = vsel %vm368, 0.0, 1.0
      %v377 = vsel %vm369, 0.0, 1.0
      %v378 = vsel %vm370, 0.0, 1.0
      %v379 = vsel %vm371, 0.0, 1.0
      %v380 = vsel %vm372, 0.0, 1.0
      %v381 = vld [vmem:[%s354] sm:$0xff]
      %v382 = vld [vmem:[%s354 + $0x8] sm:$0xff]
      %v383 = vld [vmem:[%s354 + $0x10] sm:$0xff]
      %v384 = vld [vmem:[%s354 + $0x18] sm:$0xff]
      %v385 = vld [vmem:[%s1] sm:$0xff]
      %v386 = vld [vmem:[%s1 + $0x8] sm:$0xff]
      %v387 = vld [vmem:[%s1 + $0x10] sm:$0xff]
      %v388 = vld [vmem:[%s4] sm:$0x1]
      %v389 = vrot.slane %v381, 7
      %v390 = vrot.slane %v382, 7
      %v391 = vrot.slane %v383, 7
      %v392 = vrot.slane %v384, 7
      %vm393 = vcmp.lt.s32.totalorder %v361, 1
      %v394 = vsel %vm393, %v391, %v392
      %v395 = vsel %vm393, %v390, %v391
      %v396 = vsel %vm393, %v389, %v390
      %v397 = vsel %vm393, %v392, %v389
      %v398 = vmul.f32 %v397, %v373
      %v399 = vmul.f32 %v396, %v374
      %v400 = vmul.f32 %v395, %v375
      %v401 = vmul.f32 %v394, %v376
      %vm402 = vcmask 64512
      %v404 = vsel %vm402, %v398, 0
      %v407 = vsel %vm402, %v399, 0
      %v410 = vsel %vm402, %v400, 0
      %v413 = vsel %vm402, %v401, 0
      %415 = vmatprep.subr.mxu0 0.0
      %416 = vmatpush1.msra.mxu0 %v386
      %417 = vmatprep.subr.mxu0 0.0
      %418 = vmatpush1.msra.mxu0 0.0
      %419 = vmatprep.subr.mxu0 0.0
      %420 = vmatpush1.msra.mxu0 0.0
      %421 = vmatprep.subr.mxu0 0.0
      %422 = vmatpush1.msra.mxu0 0.0
      %423 = vmatprep.subr.mxu0 0.0
      %424 = vmatpush1.msra.mxu0 0.0
      %425 = vmatprep.subr.mxu0 0.0
      %426 = vmatpush1.msra.mxu0 0.0
      %427 = vmatprep.subr.mxu0 0.0
      %428 = vmatpush1.msra.mxu0 0.0
      %429 = vmatprep.subr.mxu0 0.0
      %430 = vmatpush1.msra.mxu0 0.0
      %431 = vmatprep.subr.mxu0 0.0
      %432 = vmatpush1.msra.mxu0 0.0
      %433 = vmatprep.subr.mxu0 0.0
      %434 = vmatpush1.msra.mxu0 0.0
      %435 = vmatprep.subr.mxu0 0.0
      %436 = vmatpush1.msra.mxu0 0.0
      %437 = vmatprep.subr.mxu0 0.0
      %438 = vmatpush1.msra.mxu0 0.0
      %439 = vmatprep.subr.mxu0 0.0
      %440 = vmatpush1.msra.mxu0 0.0
      %441 = vmatprep.subr.mxu0 0.0
      %442 = vmatpush1.msra.mxu0 0.0
      %443 = vmatprep.subr.mxu0 0.0
      %444 = vmatpush1.msra.mxu0 0.0
      %445 = vmatprep.subr.mxu0 0.0
      %446 = vmatpush1.msra.mxu0 0.0
      %447 = vmatprep.subr.mxu0 0.0
      %448 = vmatpush1.msra.mxu0 0.0
      %449 = vmatprep.subr.mxu0 0.0
      %450 = vmatpush1.msra.mxu0 0.0
      %451 = vmatprep.subr.mxu0 0.0
      %452 = vmatpush1.msra.mxu0 0.0
      %453 = vmatprep.subr.mxu0 0.0
      %454 = vmatpush1.msra.mxu0 0.0
      %455 = vmatprep.subr.mxu0 0.0
      %456 = vmatpush1.msra.mxu0 0.0
      %457 = vmatprep.subr.mxu0 0.0
      %458 = vmatpush1.msra.mxu0 0.0
      %459 = vmatprep.subr.mxu0 0.0
      %460 = vmatpush1.msra.mxu0 0.0
      %461 = vmatprep.subr.mxu0 0.0
      %462 = vmatpush1.msra.mxu0 0.0
      %463 = vmatprep.subr.mxu0 0.0
      %464 = vmatpush1.msra.mxu0 0.0
      %465 = vmatprep.subr.mxu0 0.0
      %466 = vmatpush1.msra.mxu0 0.0
      %467 = vmatprep.subr.mxu0 0.0
      %468 = vmatpush1.msra.mxu0 0.0
      %469 = vmatprep.subr.mxu0 0.0
      %470 = vmatpush1.msra.mxu0 0.0
      %471 = vmatprep.subr.mxu0 0.0
      %472 = vmatpush1.msra.mxu0 0.0
      %473 = vmatprep.subr.mxu0 0.0
      %474 = vmatpush1.msra.mxu0 0.0
      %475 = vmatprep.subr.mxu0 0.0
      %476 = vmatpush1.msra.mxu0 0.0
      %477 = vmatprep.subr.mxu0 0.0
      %478 = vmatpush1.msra.mxu0 0.0
      %479 = vmatprep.mubr.f32.mxu0 0.0
      %480 = vmatmul.mubr.f32.gmra.mrb[0].mxu0 %v404
      %v481 = vpop.f32.mrb[0].mxu0
      %v482 = vadd.f32 0.0, %v481
      %v483 = vpop.f32.mrb[0].mxu0
      %484 = vmatprep.mubr.f32.mxu0 0.0
      %485 = vmatmul.mubr.f32.gmra.mrb[0].mxu0 %v407
      %v486 = vpop.f32.mrb[0].mxu0
      %v487 = vadd.f32 0.0, %v486
      %v488 = vpop.f32.mrb[0].mxu0
      %489 = vmatprep.mubr.f32.mxu0 0.0
      %490 = vmatmul.mubr.f32.gmra.mrb[0].mxu0 %v410
      %v491 = vpop.f32.mrb[0].mxu0
      %v492 = vadd.f32 0.0, %v491
      %v493 = vpop.f32.mrb[0].mxu0
      %494 = vmatprep.mubr.f32.mxu0 0.0
      %495 = vmatmul.mubr.f32.gmra.mrb[0].mxu0 %v413
      %v496 = vpop.f32.mrb[0].mxu0
      %v497 = vadd.f32 0.0, %v496
      %v498 = vpop.f32.mrb[0].mxu0
      %499 = vdwg.mxu0
      %v501 = vsel %vm402, %v381, 0
      %v504 = vsel %vm402, %v382, 0
      %v507 = vsel %vm402, %v383, 0
      %v510 = vsel %vm402, %v384, 0
      %512 = vmatprep.subr.mxu0 0.0
      %513 = vmatpush1.msra.mxu0 %v385
      %514 = vmatprep.subr.mxu0 0.0
      %515 = vmatpush1.msra.mxu0 0.0
      %516 = vmatprep.subr.mxu0 0.0
      %517 = vmatpush1.msra.mxu0 0.0
      %518 = vmatprep.subr.mxu0 0.0
      %519 = vmatpush1.msra.mxu0 0.0
      %520 = vmatprep.subr.mxu0 0.0
      %521 = vmatpush1.msra.mxu0 0.0
      %522 = vmatprep.subr.mxu0 0.0
      %523 = vmatpush1.msra.mxu0 0.0
      %524 = vmatprep.subr.mxu0 0.0
      %525 = vmatpush1.msra.mxu0 0.0
      %526 = vmatprep.subr.mxu0 0.0
      %527 = vmatpush1.msra.mxu0 0.0
      %528 = vmatprep.subr.mxu0 0.0
      %529 = vmatpush1.msra.mxu0 0.0
      %530 = vmatprep.subr.mxu0 0.0
      %531 = vmatpush1.msra.mxu0 0.0
      %532 = vmatprep.subr.mxu0 0.0
      %533 = vmatpush1.msra.mxu0 0.0
      %534 = vmatprep.subr.mxu0 0.0
      %535 = vmatpush1.msra.mxu0 0.0
      %536 = vmatprep.subr.mxu0 0.0
      %537 = vmatpush1.msra.mxu0 0.0
      %538 = vmatprep.subr.mxu0 0.0
      %539 = vmatpush1.msra.mxu0 0.0
      %540 = vmatprep.subr.mxu0 0.0
      %541 = vmatpush1.msra.mxu0 0.0
      %542 = vmatprep.subr.mxu0 0.0
      %543 = vmatpush1.msra.mxu0 0.0
      %544 = vmatprep.subr.mxu0 0.0
      %545 = vmatpush1.msra.mxu0 0.0
      %546 = vmatprep.subr.mxu0 0.0
      %547 = vmatpush1.msra.mxu0 0.0
      %548 = vmatprep.subr.mxu0 0.0
      %549 = vmatpush1.msra.mxu0 0.0
      %550 = vmatprep.subr.mxu0 0.0
      %551 = vmatpush1.msra.mxu0 0.0
      %552 = vmatprep.subr.mxu0 0.0
      %553 = vmatpush1.msra.mxu0 0.0
      %554 = vmatprep.subr.mxu0 0.0
      %555 = vmatpush1.msra.mxu0 0.0
      %556 = vmatprep.subr.mxu0 0.0
      %557 = vmatpush1.msra.mxu0 0.0
      %558 = vmatprep.subr.mxu0 0.0
      %559 = vmatpush1.msra.mxu0 0.0
      %560 = vmatprep.subr.mxu0 0.0
      %561 = vmatpush1.msra.mxu0 0.0
      %562 = vmatprep.subr.mxu0 0.0
      %563 = vmatpush1.msra.mxu0 0.0
      %564 = vmatprep.subr.mxu0 0.0
      %565 = vmatpush1.msra.mxu0 0.0
      %566 = vmatprep.subr.mxu0 0.0
      %567 = vmatpush1.msra.mxu0 0.0
      %568 = vmatprep.subr.mxu0 0.0
      %569 = vmatpush1.msra.mxu0 0.0
      %570 = vmatprep.subr.mxu0 0.0
      %571 = vmatpush1.msra.mxu0 0.0
      %572 = vmatprep.subr.mxu0 0.0
      %573 = vmatpush1.msra.mxu0 0.0
      %574 = vmatprep.subr.mxu0 0.0
      %575 = vmatpush1.msra.mxu0 0.0
      %576 = vmatprep.mubr.f32.mxu0 0.0
      %577 = vmatmul.mubr.f32.gmra.mrb[0].mxu0 %v501
      %v578 = vpop.f32.mrb[0].mxu0
      %v579 = vadd.f32 %v482, %v578
      %v580 = vpop.f32.mrb[0].mxu0
      %581 = vmatprep.mubr.f32.mxu0 0.0
      %582 = vmatmul.mubr.f32.gmra.mrb[0].mxu0 %v504
      %v583 = vpop.f32.mrb[0].mxu0
      %v584 = vadd.f32 %v487, %v583
      %v585 = vpop.f32.mrb[0].mxu0
      %586 = vmatprep.mubr.f32.mxu0 0.0
      %587 = vmatmul.mubr.f32.gmra.mrb[0].mxu0 %v507
      %v588 = vpop.f32.mrb[0].mxu0
      %v589 = vadd.f32 %v492, %v588
      %v590 = vpop.f32.mrb[0].mxu0
      %591 = vmatprep.mubr.f32.mxu0 0.0
      %592 = vmatmul.mubr.f32.gmra.mrb[0].mxu0 %v510
      %v593 = vpop.f32.mrb[0].mxu0
      %v594 = vadd.f32 %v497, %v593
      %v595 = vpop.f32.mrb[0].mxu0
      %596 = vdwg.mxu0
      %v597 = vrot.slane %v381, 1
      %v598 = vrot.slane %v382, 1
      %v599 = vrot.slane %v383, 1
      %v600 = vrot.slane %v384, 1
      %vm601 = vcmp.lt.s32.totalorder %v361, 7
      %v602 = vsel %vm601, %v599, %v600
      %v603 = vsel %vm601, %v598, %v599
      %v604 = vsel %vm601, %v597, %v598
      %v605 = vsel %vm601, %v600, %v597
      %v606 = vmul.f32 %v604, %v377
      %v607 = vmul.f32 %v603, %v378
      %v608 = vmul.f32 %v602, %v379
      %v609 = vmul.f32 %v605, %v380
      %v611 = vsel %vm402, %v606, 0
      %v614 = vsel %vm402, %v607, 0
      %v617 = vsel %vm402, %v608, 0
      %v620 = vsel %vm402, %v609, 0
      %622 = vmatprep.subr.mxu0 0.0
      %623 = vmatpush1.msra.mxu0 %v387
      %624 = vmatprep.subr.mxu0 0.0
      %625 = vmatpush1.msra.mxu0 0.0
      %626 = vmatprep.subr.mxu0 0.0
      %627 = vmatpush1.msra.mxu0 0.0
      %628 = vmatprep.subr.mxu0 0.0
      %629 = vmatpush1.msra.mxu0 0.0
      %630 = vmatprep.subr.mxu0 0.0
      %631 = vmatpush1.msra.mxu0 0.0
      %632 = vmatprep.subr.mxu0 0.0
      %633 = vmatpush1.msra.mxu0 0.0
      %634 = vmatprep.subr.mxu0 0.0
      %635 = vmatpush1.msra.mxu0 0.0
      %636 = vmatprep.subr.mxu0 0.0
      %637 = vmatpush1.msra.mxu0 0.0
      %638 = vmatprep.subr.mxu0 0.0
      %639 = vmatpush1.msra.mxu0 0.0
      %640 = vmatprep.subr.mxu0 0.0
      %641 = vmatpush1.msra.mxu0 0.0
      %642 = vmatprep.subr.mxu0 0.0
      %643 = vmatpush1.msra.mxu0 0.0
      %644 = vmatprep.subr.mxu0 0.0
      %645 = vmatpush1.msra.mxu0 0.0
      %646 = vmatprep.subr.mxu0 0.0
      %647 = vmatpush1.msra.mxu0 0.0
      %648 = vmatprep.subr.mxu0 0.0
      %649 = vmatpush1.msra.mxu0 0.0
      %650 = vmatprep.subr.mxu0 0.0
      %651 = vmatpush1.msra.mxu0 0.0
      %652 = vmatprep.subr.mxu0 0.0
      %653 = vmatpush1.msra.mxu0 0.0
      %654 = vmatprep.subr.mxu0 0.0
      %655 = vmatpush1.msra.mxu0 0.0
      %656 = vmatprep.subr.mxu0 0.0
      %657 = vmatpush1.msra.mxu0 0.0
      %658 = vmatprep.subr.mxu0 0.0
      %659 = vmatpush1.msra.mxu0 0.0
      %660 = vmatprep.subr.mxu0 0.0
      %661 = vmatpush1.msra.mxu0 0.0
      %662 = vmatprep.subr.mxu0 0.0
      %663 = vmatpush1.msra.mxu0 0.0
      %664 = vmatprep.subr.mxu0 0.0
      %665 = vmatpush1.msra.mxu0 0.0
      %666 = vmatprep.subr.mxu0 0.0
      %667 = vmatpush1.msra.mxu0 0.0
      %668 = vmatprep.subr.mxu0 0.0
      %669 = vmatpush1.msra.mxu0 0.0
      %670 = vmatprep.subr.mxu0 0.0
      %671 = vmatpush1.msra.mxu0 0.0
      %672 = vmatprep.subr.mxu0 0.0
      %673 = vmatpush1.msra.mxu0 0.0
      %674 = vmatprep.subr.mxu0 0.0
      %675 = vmatpush1.msra.mxu0 0.0
      %676 = vmatprep.subr.mxu0 0.0
      %677 = vmatpush1.msra.mxu0 0.0
      %678 = vmatprep.subr.mxu0 0.0
      %679 = vmatpush1.msra.mxu0 0.0
      %680 = vmatprep.subr.mxu0 0.0
      %681 = vmatpush1.msra.mxu0 0.0
      %682 = vmatprep.subr.mxu0 0.0
      %683 = vmatpush1.msra.mxu0 0.0
      %684 = vmatprep.subr.mxu0 0.0
      %685 = vmatpush1.msra.mxu0 0.0
      %686 = vmatprep.mubr.f32.mxu0 0.0
      %687 = vmatmul.mubr.f32.gmra.mrb[0].mxu0 %v611
      %v688 = vpop.f32.mrb[0].mxu0
      %v689 = vadd.f32 0.0, %v688
      %v690 = vpop.f32.mrb[0].mxu0
      %691 = vmatprep.mubr.f32.mxu0 0.0
      %692 = vmatmul.mubr.f32.gmra.mrb[0].mxu0 %v614
      %v693 = vpop.f32.mrb[0].mxu0
      %v694 = vadd.f32 0.0, %v693
      %v695 = vpop.f32.mrb[0].mxu0
      %696 = vmatprep.mubr.f32.mxu0 0.0
      %697 = vmatmul.mubr.f32.gmra.mrb[0].mxu0 %v617
      %v698 = vpop.f32.mrb[0].mxu0
      %v699 = vadd.f32 0.0, %v698
      %v700 = vpop.f32.mrb[0].mxu0
      %701 = vmatprep.mubr.f32.mxu0 0.0
      %702 = vmatmul.mubr.f32.gmra.mrb[0].mxu0 %v620
      %v703 = vpop.f32.mrb[0].mxu0
      %v704 = vadd.f32 0.0, %v703
      %v705 = vpop.f32.mrb[0].mxu0
      %706 = vdwg.mxu0
      %v707 = vadd.f32 %v579, %v689
      %v708 = vadd.f32 %v584, %v694
      %v709 = vadd.f32 %v589, %v699
      %v710 = vadd.f32 %v594, %v704
      %v712 = vlaneseq
      %v713 = vshrl.u32 %v712, 7
      %v714 = vsub.s32 0, %v713
      %v715 = vrot.slane %v388, %v714
      %v717 = vadd.f32 %v707, %v715
      %v718 = vadd.f32 %v708, %v715
      %v719 = vadd.f32 %v709, %v715
      %v720 = vadd.f32 %v710, %v715
      %v721 = vmax.f32 %v717, 0.0
      %v722 = vmax.f32 %v718, 0.0
      %v723 = vmax.f32 %v719, 0.0
      %v724 = vmax.f32 %v720, 0.0
      %v725 = vld [vmem:[%s2] sm:$0xff]
      %v726 = vld [vmem:[%s2 + $0x8] sm:$0xff]
      %v727 = vld [vmem:[%s2 + $0x10] sm:$0xff]
      %v728 = vld [vmem:[%s2 + $0x18] sm:$0xff]
      %v729 = vld [vmem:[%s2 + $0x20] sm:$0xff]
      %v730 = vld [vmem:[%s2 + $0x28] sm:$0xff]
      %v731 = vld [vmem:[%s2 + $0x30] sm:$0xff]
      %v732 = vld [vmem:[%s2 + $0x38] sm:$0xff]
      %v733 = vld [vmem:[%s2 + $0x40] sm:$0xff]
      %v734 = vld [vmem:[%s2 + $0x48] sm:$0xff]
      %v735 = vld [vmem:[%s2 + $0x50] sm:$0xff]
      %v736 = vld [vmem:[%s2 + $0x58] sm:$0xff]
      %v737 = vld [vmem:[%s2 + $0x60] sm:$0xff]
      %v738 = vld [vmem:[%s2 + $0x68] sm:$0xff]
      %v739 = vld [vmem:[%s2 + $0x70] sm:$0xff]
      %v740 = vld [vmem:[%s2 + $0x78] sm:$0xff]
      %v741 = vld [vmem:[%s2 + $0x80] sm:$0xff]
      %v742 = vld [vmem:[%s2 + $0x88] sm:$0xff]
      %v743 = vld [vmem:[%s2 + $0x90] sm:$0xff]
      %v744 = vld [vmem:[%s2 + $0x98] sm:$0xff]
      %v745 = vld [vmem:[%s2 + $0xa0] sm:$0xff]
      %v746 = vld [vmem:[%s2 + $0xa8] sm:$0xff]
      %v747 = vld [vmem:[%s2 + $0xb0] sm:$0xff]
      %v748 = vld [vmem:[%s2 + $0xb8] sm:$0xff]
      %v749 = vld [vmem:[%s5] sm:$0x1]
      %v750 = vrot.slane %v721, 7
      %v751 = vrot.slane %v722, 7
      %v752 = vrot.slane %v723, 7
      %v753 = vrot.slane %v724, 7
      %v754 = vsel %vm393, %v752, %v753
      %v755 = vsel %vm393, %v751, %v752
      %v756 = vsel %vm393, %v750, %v751
      %v757 = vsel %vm393, %v753, %v750
      %v758 = vmul.f32 %v757, %v373
      %v759 = vmul.f32 %v756, %v374
      %v760 = vmul.f32 %v755, %v375
      %v761 = vmul.f32 %v754, %v376
      %vm762 = vcmask 523264
      %v764 = vsel %vm762, %v758, 0
      %v767 = vsel %vm762, %v759, 0
      %v770 = vsel %vm762, %v760, 0
      %v773 = vsel %vm762, %v761, 0
      %775 = vmatprep.subr.mxu0 0.0
      %776 = vmatpush1.msra.mxu0 %v733
      %777 = vmatprep.subr.mxu0 0.0
      %778 = vmatpush1.msra.mxu0 %v734
      %779 = vmatprep.subr.mxu0 0.0
      %780 = vmatpush1.msra.mxu0 %v735
      %781 = vmatprep.subr.mxu0 0.0
      %782 = vmatpush1.msra.mxu0 %v736
      %783 = vmatprep.subr.mxu0 0.0
      %784 = vmatpush1.msra.mxu0 %v737
      %785 = vmatprep.subr.mxu0 0.0
      %786 = vmatpush1.msra.mxu0 %v738
      %787 = vmatprep.subr.mxu0 0.0
      %788 = vmatpush1.msra.mxu0 %v739
      %789 = vmatprep.subr.mxu0 0.0
      %790 = vmatpush1.msra.mxu0 %v740
      %791 = vmatprep.subr.mxu0 0.0
      %792 = vmatpush1.msra.mxu0 0.0
      %793 = vmatprep.subr.mxu0 0.0
      %794 = vmatpush1.msra.mxu0 0.0
      %795 = vmatprep.subr.mxu0 0.0
      %796 = vmatpush1.msra.mxu0 0.0
      %797 = vmatprep.subr.mxu0 0.0
      %798 = vmatpush1.msra.mxu0 0.0
      %799 = vmatprep.subr.mxu0 0.0
      %800 = vmatpush1.msra.mxu0 0.0
      %801 = vmatprep.subr.mxu0 0.0
      %802 = vmatpush1.msra.mxu0 0.0
      %803 = vmatprep.subr.mxu0 0.0
      %804 = vmatpush1.msra.mxu0 0.0
      %805 = vmatprep.subr.mxu0 0.0
      %806 = vmatpush1.msra.mxu0 0.0
      %807 = vmatprep.subr.mxu0 0.0
      %808 = vmatpush1.msra.mxu0 0.0
      %809 = vmatprep.subr.mxu0 0.0
      %810 = vmatpush1.msra.mxu0 0.0
      %811 = vmatprep.subr.mxu0 0.0
      %812 = vmatpush1.msra.mxu0 0.0
      %813 = vmatprep.subr.mxu0 0.0
      %814 = vmatpush1.msra.mxu0 0.0
      %815 = vmatprep.subr.mxu0 0.0
      %816 = vmatpush1.msra.mxu0 0.0
      %817 = vmatprep.subr.mxu0 0.0
      %818 = vmatpush1.msra.mxu0 0.0
      %819 = vmatprep.subr.mxu0 0.0
      %820 = vmatpush1.msra.mxu0 0.0
      %821 = vmatprep.subr.mxu0 0.0
      %822 = vmatpush1.msra.mxu0 0.0
      %823 = vmatprep.subr.mxu0 0.0
      %824 = vmatpush1.msra.mxu0 0.0
      %825 = vmatprep.subr.mxu0 0.0
      %826 = vmatpush1.msra.mxu0 0.0
      %827 = vmatprep.subr.mxu0 0.0
      %828 = vmatpush1.msra.mxu0 0.0
      %829 = vmatprep.subr.mxu0 0.0
      %830 = vmatpush1.msra.mxu0 0.0
      %831 = vmatprep.subr.mxu0 0.0
      %832 = vmatpush1.msra.mxu0 0.0
      %833 = vmatprep.subr.mxu0 0.0
      %834 = vmatpush1.msra.mxu0 0.0
      %835 = vmatprep.subr.mxu0 0.0
      %836 = vmatpush1.msra.mxu0 0.0
      %837 = vmatprep.subr.mxu0 0.0
      %838 = vmatpush1.msra.mxu0 0.0
      %839 = vmatprep.mubr.f32.mxu0 0.0
      %840 = vmatmul.mubr.f32.gmra.mrb[0].mxu0 %v764
      %v841 = vpop.f32.mrb[0].mxu0
      %v842 = vadd.f32 0.0, %v841
      %v843 = vpop.f32.mrb[0].mxu0
      %844 = vmatprep.mubr.f32.mxu0 0.0
      %845 = vmatmul.mubr.f32.gmra.mrb[0].mxu0 %v767
      %v846 = vpop.f32.mrb[0].mxu0
      %v847 = vadd.f32 0.0, %v846
      %v848 = vpop.f32.mrb[0].mxu0
      %849 = vmatprep.mubr.f32.mxu0 0.0
      %850 = vmatmul.mubr.f32.gmra.mrb[0].mxu0 %v770
      %v851 = vpop.f32.mrb[0].mxu0
      %v852 = vadd.f32 0.0, %v851
      %v853 = vpop.f32.mrb[0].mxu0
      %854 = vmatprep.mubr.f32.mxu0 0.0
      %855 = vmatmul.mubr.f32.gmra.mrb[0].mxu0 %v773
      %v856 = vpop.f32.mrb[0].mxu0
      %v857 = vadd.f32 0.0, %v856
      %v858 = vpop.f32.mrb[0].mxu0
      %859 = vdwg.mxu0
      %v861 = vsel %vm762, %v721, 0
      %v864 = vsel %vm762, %v722, 0
      %v867 = vsel %vm762, %v723, 0
      %v870 = vsel %vm762, %v724, 0
      %872 = vmatprep.subr.mxu0 0.0
      %873 = vmatpush1.msra.mxu0 %v725
      %874 = vmatprep.subr.mxu0 0.0
      %875 = vmatpush1.msra.mxu0 %v726
      %876 = vmatprep.subr.mxu0 0.0
      %877 = vmatpush1.msra.mxu0 %v727
      %878 = vmatprep.subr.mxu0 0.0
      %879 = vmatpush1.msra.mxu0 %v728
      %880 = vmatprep.subr.mxu0 0.0
      %881 = vmatpush1.msra.mxu0 %v729
      %882 = vmatprep.subr.mxu0 0.0
      %883 = vmatpush1.msra.mxu0 %v730
      %884 = vmatprep.subr.mxu0 0.0
      %885 = vmatpush1.msra.mxu0 %v731
      %886 = vmatprep.subr.mxu0 0.0
      %887 = vmatpush1.msra.mxu0 %v732
      %888 = vmatprep.subr.mxu0 0.0
      %889 = vmatpush1.msra.mxu0 0.0
      %890 = vmatprep.subr.mxu0 0.0
      %891 = vmatpush1.msra.mxu0 0.0
      %892 = vmatprep.subr.mxu0 0.0
      %893 = vmatpush1.msra.mxu0 0.0
      %894 = vmatprep.subr.mxu0 0.0
      %895 = vmatpush1.msra.mxu0 0.0
      %896 = vmatprep.subr.mxu0 0.0
      %897 = vmatpush1.msra.mxu0 0.0
      %898 = vmatprep.subr.mxu0 0.0
      %899 = vmatpush1.msra.mxu0 0.0
      %900 = vmatprep.subr.mxu0 0.0
      %901 = vmatpush1.msra.mxu0 0.0
      %902 = vmatprep.subr.mxu0 0.0
      %903 = vmatpush1.msra.mxu0 0.0
      %904 = vmatprep.subr.mxu0 0.0
      %905 = vmatpush1.msra.mxu0 0.0
      %906 = vmatprep.subr.mxu0 0.0
      %907 = vmatpush1.msra.mxu0 0.0
      %908 = vmatprep.subr.mxu0 0.0
      %909 = vmatpush1.msra.mxu0 0.0
      %910 = vmatprep.subr.mxu0 0.0
      %911 = vmatpush1.msra.mxu0 0.0
      %912 = vmatprep.subr.mxu0 0.0
      %913 = vmatpush1.msra.mxu0 0.0
      %914 = vmatprep.subr.mxu0 0.0
      %915 = vmatpush1.msra.mxu0 0.0
      %916 = vmatprep.subr.mxu0 0.0
      %917 = vmatpush1.msra.mxu0 0.0
      %918 = vmatprep.subr.mxu0 0.0
      %919 = vmatpush1.msra.mxu0 0.0
      %920 = vmatprep.subr.mxu0 0.0
      %921 = vmatpush1.msra.mxu0 0.0
      %922 = vmatprep.subr.mxu0 0.0
      %923 = vmatpush1.msra.mxu0 0.0
      %924 = vmatprep.subr.mxu0 0.0
      %925 = vmatpush1.msra.mxu0 0.0
      %926 = vmatprep.subr.mxu0 0.0
      %927 = vmatpush1.msra.mxu0 0.0
      %928 = vmatprep.subr.mxu0 0.0
      %929 = vmatpush1.msra.mxu0 0.0
      %930 = vmatprep.subr.mxu0 0.0
      %931 = vmatpush1.msra.mxu0 0.0
      %932 = vmatprep.subr.mxu0 0.0
      %933 = vmatpush1.msra.mxu0 0.0
      %934 = vmatprep.subr.mxu0 0.0
      %935 = vmatpush1.msra.mxu0 0.0
      %936 = vmatprep.mubr.f32.mxu0 0.0
      %937 = vmatmul.mubr.f32.gmra.mrb[0].mxu0 %v861
      %v938 = vpop.f32.mrb[0].mxu0
      %v939 = vadd.f32 %v842, %v938
      %v940 = vpop.f32.mrb[0].mxu0
      %941 = vmatprep.mubr.f32.mxu0 0.0
      %942 = vmatmul.mubr.f32.gmra.mrb[0].mxu0 %v864
      %v943 = vpop.f32.mrb[0].mxu0
      %v944 = vadd.f32 %v847, %v943
      %v945 = vpop.f32.mrb[0].mxu0
      %946 = vmatprep.mubr.f32.mxu0 0.0
      %947 = vmatmul.mubr.f32.gmra.mrb[0].mxu0 %v867
      %v948 = vpop.f32.mrb[0].mxu0
      %v949 = vadd.f32 %v852, %v948
      %v950 = vpop.f32.mrb[0].mxu0
      %951 = vmatprep.mubr.f32.mxu0 0.0
      %952 = vmatmul.mubr.f32.gmra.mrb[0].mxu0 %v870
      %v953 = vpop.f32.mrb[0].mxu0
      %v954 = vadd.f32 %v857, %v953
      %v955 = vpop.f32.mrb[0].mxu0
      %956 = vdwg.mxu0
      %v957 = vrot.slane %v721, 1
      %v958 = vrot.slane %v722, 1
      %v959 = vrot.slane %v723, 1
      %v960 = vrot.slane %v724, 1
      %v961 = vsel %vm601, %v959, %v960
      %v962 = vsel %vm601, %v958, %v959
      %v963 = vsel %vm601, %v957, %v958
      %v964 = vsel %vm601, %v960, %v957
      %v965 = vmul.f32 %v963, %v377
      %v966 = vmul.f32 %v962, %v378
      %v967 = vmul.f32 %v961, %v379
      %v968 = vmul.f32 %v964, %v380
      %v970 = vsel %vm762, %v965, 0
      %v973 = vsel %vm762, %v966, 0
      %v976 = vsel %vm762, %v967, 0
      %v979 = vsel %vm762, %v968, 0
      %981 = vmatprep.subr.mxu0 0.0
      %982 = vmatpush1.msra.mxu0 %v741
      %983 = vmatprep.subr.mxu0 0.0
      %984 = vmatpush1.msra.mxu0 %v742
      %985 = vmatprep.subr.mxu0 0.0
      %986 = vmatpush1.msra.mxu0 %v743
      %987 = vmatprep.subr.mxu0 0.0
      %988 = vmatpush1.msra.mxu0 %v744
      %989 = vmatprep.subr.mxu0 0.0
      %990 = vmatpush1.msra.mxu0 %v745
      %991 = vmatprep.subr.mxu0 0.0
      %992 = vmatpush1.msra.mxu0 %v746
      %993 = vmatprep.subr.mxu0 0.0
      %994 = vmatpush1.msra.mxu0 %v747
      %995 = vmatprep.subr.mxu0 0.0
      %996 = vmatpush1.msra.mxu0 %v748
      %997 = vmatprep.subr.mxu0 0.0
      %998 = vmatpush1.msra.mxu0 0.0
      %999 = vmatprep.subr.mxu0 0.0
      %1000 = vmatpush1.msra.mxu0 0.0
      %1001 = vmatprep.subr.mxu0 0.0
      %1002 = vmatpush1.msra.mxu0 0.0
      %1003 = vmatprep.subr.mxu0 0.0
      %1004 = vmatpush1.msra.mxu0 0.0
      %1005 = vmatprep.subr.mxu0 0.0
      %1006 = vmatpush1.msra.mxu0 0.0
      %1007 = vmatprep.subr.mxu0 0.0
      %1008 = vmatpush1.msra.mxu0 0.0
      %1009 = vmatprep.subr.mxu0 0.0
      %1010 = vmatpush1.msra.mxu0 0.0
      %1011 = vmatprep.subr.mxu0 0.0
      %1012 = vmatpush1.msra.mxu0 0.0
      %1013 = vmatprep.subr.mxu0 0.0
      %1014 = vmatpush1.msra.mxu0 0.0
      %1015 = vmatprep.subr.mxu0 0.0
      %1016 = vmatpush1.msra.mxu0 0.0
      %1017 = vmatprep.subr.mxu0 0.0
      %1018 = vmatpush1.msra.mxu0 0.0
      %1019 = vmatprep.subr.mxu0 0.0
      %1020 = vmatpush1.msra.mxu0 0.0
      %1021 = vmatprep.subr.mxu0 0.0
      %1022 = vmatpush1.msra.mxu0 0.0
      %1023 = vmatprep.subr.mxu0 0.0
      %1024 = vmatpush1.msra.mxu0 0.0
      %1025 = vmatprep.subr.mxu0 0.0
      %1026 = vmatpush1.msra.mxu0 0.0
      %1027 = vmatprep.subr.mxu0 0.0
      %1028 = vmatpush1.msra.mxu0 0.0
      %1029 = vmatprep.subr.mxu0 0.0
      %1030 = vmatpush1.msra.mxu0 0.0
      %1031 = vmatprep.subr.mxu0 0.0
      %1032 = vmatpush1.msra.mxu0 0.0
      %1033 = vmatprep.subr.mxu0 0.0
      %1034 = vmatpush1.msra.mxu0 0.0
      %1035 = vmatprep.subr.mxu0 0.0
      %1036 = vmatpush1.msra.mxu0 0.0
      %1037 = vmatprep.subr.mxu0 0.0
      %1038 = vmatpush1.msra.mxu0 0.0
      %1039 = vmatprep.subr.mxu0 0.0
      %1040 = vmatpush1.msra.mxu0 0.0
      %1041 = vmatprep.subr.mxu0 0.0
      %1042 = vmatpush1.msra.mxu0 0.0
      %1043 = vmatprep.subr.mxu0 0.0
      %1044 = vmatpush1.msra.mxu0 0.0
      %1045 = vmatprep.mubr.f32.mxu0 0.0
      %1046 = vmatmul.mubr.f32.gmra.mrb[0].mxu0 %v970
      %v1047 = vpop.f32.mrb[0].mxu0
      %v1048 = vadd.f32 0.0, %v1047
      %v1049 = vpop.f32.mrb[0].mxu0
      %1050 = vmatprep.mubr.f32.mxu0 0.0
      %1051 = vmatmul.mubr.f32.gmra.mrb[0].mxu0 %v973
      %v1052 = vpop.f32.mrb[0].mxu0
      %v1053 = vadd.f32 0.0, %v1052
      %v1054 = vpop.f32.mrb[0].mxu0
      %1055 = vmatprep.mubr.f32.mxu0 0.0
      %1056 = vmatmul.mubr.f32.gmra.mrb[0].mxu0 %v976
      %v1057 = vpop.f32.mrb[0].mxu0
      %v1058 = vadd.f32 0.0, %v1057
      %v1059 = vpop.f32.mrb[0].mxu0
      %1060 = vmatprep.mubr.f32.mxu0 0.0
      %1061 = vmatmul.mubr.f32.gmra.mrb[0].mxu0 %v979
      %v1062 = vpop.f32.mrb[0].mxu0
      %v1063 = vadd.f32 0.0, %v1062
      %v1064 = vpop.f32.mrb[0].mxu0
      %1065 = vdwg.mxu0
      %v1066 = vadd.f32 %v939, %v1048
      %v1067 = vadd.f32 %v944, %v1053
      %v1068 = vadd.f32 %v949, %v1058
      %v1069 = vadd.f32 %v954, %v1063
      %v1071 = vlaneseq
      %v1072 = vshrl.u32 %v1071, 7
      %v1073 = vsub.s32 0, %v1072
      %v1074 = vrot.slane %v749, %v1073
      %v1076 = vadd.f32 %v1066, %v1074
      %v1077 = vadd.f32 %v1067, %v1074
      %v1078 = vadd.f32 %v1068, %v1074
      %v1079 = vadd.f32 %v1069, %v1074
      %v1080 = vmax.f32 %v1076, 0.0
      %v1081 = vmax.f32 %v1077, 0.0
      %v1082 = vmax.f32 %v1078, 0.0
      %v1083 = vmax.f32 %v1079, 0.0
      %v1084 = vld [vmem:[%s2 + $0xc0] sm:$0xff]
      %v1085 = vld [vmem:[%s2 + $0xc8] sm:$0xff]
      %v1086 = vld [vmem:[%s2 + $0xd0] sm:$0xff]
      %v1087 = vld [vmem:[%s2 + $0xd8] sm:$0xff]
      %v1088 = vld [vmem:[%s2 + $0xe0] sm:$0xff]
      %v1089 = vld [vmem:[%s2 + $0xe8] sm:$0xff]
      %v1090 = vld [vmem:[%s2 + $0xf0] sm:$0xff]
      %v1091 = vld [vmem:[%s2 + $0xf8] sm:$0xff]
      %v1092 = vld [vmem:[%s2 + $0x100] sm:$0xff]
      %v1093 = vld [vmem:[%s2 + $0x108] sm:$0xff]
      %v1094 = vld [vmem:[%s2 + $0x110] sm:$0xff]
      %v1095 = vld [vmem:[%s2 + $0x118] sm:$0xff]
      %v1096 = vld [vmem:[%s2 + $0x120] sm:$0xff]
      %v1097 = vld [vmem:[%s2 + $0x128] sm:$0xff]
      %v1098 = vld [vmem:[%s2 + $0x130] sm:$0xff]
      %v1099 = vld [vmem:[%s2 + $0x138] sm:$0xff]
      %v1100 = vld [vmem:[%s2 + $0x140] sm:$0xff]
      %v1101 = vld [vmem:[%s2 + $0x148] sm:$0xff]
      %v1102 = vld [vmem:[%s2 + $0x150] sm:$0xff]
      %v1103 = vld [vmem:[%s2 + $0x158] sm:$0xff]
      %v1104 = vld [vmem:[%s2 + $0x160] sm:$0xff]
      %v1105 = vld [vmem:[%s2 + $0x168] sm:$0xff]
      %v1106 = vld [vmem:[%s2 + $0x170] sm:$0xff]
      %v1107 = vld [vmem:[%s2 + $0x178] sm:$0xff]
      %v1108 = vld [vmem:[%s6] sm:$0x1]
      %v1109 = vrot.slane %v1080, 7
      %v1110 = vrot.slane %v1081, 7
      %v1111 = vrot.slane %v1082, 7
      %v1112 = vrot.slane %v1083, 7
      %v1113 = vsel %vm393, %v1111, %v1112
      %v1114 = vsel %vm393, %v1110, %v1111
      %v1115 = vsel %vm393, %v1109, %v1110
      %v1116 = vsel %vm393, %v1112, %v1109
      %v1117 = vmul.f32 %v1116, %v373
      %v1118 = vmul.f32 %v1115, %v374
      %v1119 = vmul.f32 %v1114, %v375
      %v1120 = vmul.f32 %v1113, %v376
      %v1122 = vsel %vm762, %v1117, 0
      %v1125 = vsel %vm762, %v1118, 0
      %v1128 = vsel %vm762, %v1119, 0
      %v1131 = vsel %vm762, %v1120, 0
      %1133 = vmatprep.subr.mxu0 0.0
      %1134 = vmatpush1.msra.mxu0 %v1092
      %1135 = vmatprep.subr.mxu0 0.0
      %1136 = vmatpush1.msra.mxu0 %v1093
      %1137 = vmatprep.subr.mxu0 0.0
      %1138 = vmatpush1.msra.mxu0 %v1094
      %1139 = vmatprep.subr.mxu0 0.0
      %1140 = vmatpush1.msra.mxu0 %v1095
      %1141 = vmatprep.subr.mxu0 0.0
      %1142 = vmatpush1.msra.mxu0 %v1096
      %1143 = vmatprep.subr.mxu0 0.0
      %1144 = vmatpush1.msra.mxu0 %v1097
      %1145 = vmatprep.subr.mxu0 0.0
      %1146 = vmatpush1.msra.mxu0 %v1098
      %1147 = vmatprep.subr.mxu0 0.0
      %1148 = vmatpush1.msra.mxu0 %v1099
      %1149 = vmatprep.subr.mxu0 0.0
      %1150 = vmatpush1.msra.mxu0 0.0
      %1151 = vmatprep.subr.mxu0 0.0
      %1152 = vmatpush1.msra.mxu0 0.0
      %1153 = vmatprep.subr.mxu0 0.0
      %1154 = vmatpush1.msra.mxu0 0.0
      %1155 = vmatprep.subr.mxu0 0.0
      %1156 = vmatpush1.msra.mxu0 0.0
      %1157 = vmatprep.subr.mxu0 0.0
      %1158 = vmatpush1.msra.mxu0 0.0
      %1159 = vmatprep.subr.mxu0 0.0
      %1160 = vmatpush1.msra.mxu0 0.0
      %1161 = vmatprep.subr.mxu0 0.0
      %1162 = vmatpush1.msra.mxu0 0.0
      %1163 = vmatprep.subr.mxu0 0.0
      %1164 = vmatpush1.msra.mxu0 0.0
      %1165 = vmatprep.subr.mxu0 0.0
      %1166 = vmatpush1.msra.mxu0 0.0
      %1167 = vmatprep.subr.mxu0 0.0
      %1168 = vmatpush1.msra.mxu0 0.0
      %1169 = vmatprep.subr.mxu0 0.0
      %1170 = vmatpush1.msra.mxu0 0.0
      %1171 = vmatprep.subr.mxu0 0.0
      %1172 = vmatpush1.msra.mxu0 0.0
      %1173 = vmatprep.subr.mxu0 0.0
      %1174 = vmatpush1.msra.mxu0 0.0
      %1175 = vmatprep.subr.mxu0 0.0
      %1176 = vmatpush1.msra.mxu0 0.0
      %1177 = vmatprep.subr.mxu0 0.0
      %1178 = vmatpush1.msra.mxu0 0.0
      %1179 = vmatprep.subr.mxu0 0.0
      %1180 = vmatpush1.msra.mxu0 0.0
      %1181 = vmatprep.subr.mxu0 0.0
      %1182 = vmatpush1.msra.mxu0 0.0
      %1183 = vmatprep.subr.mxu0 0.0
      %1184 = vmatpush1.msra.mxu0 0.0
      %1185 = vmatprep.subr.mxu0 0.0
      %1186 = vmatpush1.msra.mxu0 0.0
      %1187 = vmatprep.subr.mxu0 0.0
      %1188 = vmatpush1.msra.mxu0 0.0
      %1189 = vmatprep.subr.mxu0 0.0
      %1190 = vmatpush1.msra.mxu0 0.0
      %1191 = vmatprep.subr.mxu0 0.0
      %1192 = vmatpush1.msra.mxu0 0.0
      %1193 = vmatprep.subr.mxu0 0.0
      %1194 = vmatpush1.msra.mxu0 0.0
      %1195 = vmatprep.subr.mxu0 0.0
      %1196 = vmatpush1.msra.mxu0 0.0
      %1197 = vmatprep.mubr.f32.mxu0 0.0
      %1198 = vmatmul.mubr.f32.gmra.mrb[0].mxu0 %v1122
      %v1199 = vpop.f32.mrb[0].mxu0
      %v1200 = vadd.f32 0.0, %v1199
      %v1201 = vpop.f32.mrb[0].mxu0
      %1202 = vmatprep.mubr.f32.mxu0 0.0
      %1203 = vmatmul.mubr.f32.gmra.mrb[0].mxu0 %v1125
      %v1204 = vpop.f32.mrb[0].mxu0
      %v1205 = vadd.f32 0.0, %v1204
      %v1206 = vpop.f32.mrb[0].mxu0
      %1207 = vmatprep.mubr.f32.mxu0 0.0
      %1208 = vmatmul.mubr.f32.gmra.mrb[0].mxu0 %v1128
      %v1209 = vpop.f32.mrb[0].mxu0
      %v1210 = vadd.f32 0.0, %v1209
      %v1211 = vpop.f32.mrb[0].mxu0
      %1212 = vmatprep.mubr.f32.mxu0 0.0
      %1213 = vmatmul.mubr.f32.gmra.mrb[0].mxu0 %v1131
      %v1214 = vpop.f32.mrb[0].mxu0
      %v1215 = vadd.f32 0.0, %v1214
      %v1216 = vpop.f32.mrb[0].mxu0
      %1217 = vdwg.mxu0
      %v1219 = vsel %vm762, %v1080, 0
      %v1222 = vsel %vm762, %v1081, 0
      %v1225 = vsel %vm762, %v1082, 0
      %v1228 = vsel %vm762, %v1083, 0
      %1230 = vmatprep.subr.mxu0 0.0
      %1231 = vmatpush1.msra.mxu0 %v1084
      %1232 = vmatprep.subr.mxu0 0.0
      %1233 = vmatpush1.msra.mxu0 %v1085
      %1234 = vmatprep.subr.mxu0 0.0
      %1235 = vmatpush1.msra.mxu0 %v1086
      %1236 = vmatprep.subr.mxu0 0.0
      %1237 = vmatpush1.msra.mxu0 %v1087
      %1238 = vmatprep.subr.mxu0 0.0
      %1239 = vmatpush1.msra.mxu0 %v1088
      %1240 = vmatprep.subr.mxu0 0.0
      %1241 = vmatpush1.msra.mxu0 %v1089
      %1242 = vmatprep.subr.mxu0 0.0
      %1243 = vmatpush1.msra.mxu0 %v1090
      %1244 = vmatprep.subr.mxu0 0.0
      %1245 = vmatpush1.msra.mxu0 %v1091
      %1246 = vmatprep.subr.mxu0 0.0
      %1247 = vmatpush1.msra.mxu0 0.0
      %1248 = vmatprep.subr.mxu0 0.0
      %1249 = vmatpush1.msra.mxu0 0.0
      %1250 = vmatprep.subr.mxu0 0.0
      %1251 = vmatpush1.msra.mxu0 0.0
      %1252 = vmatprep.subr.mxu0 0.0
      %1253 = vmatpush1.msra.mxu0 0.0
      %1254 = vmatprep.subr.mxu0 0.0
      %1255 = vmatpush1.msra.mxu0 0.0
      %1256 = vmatprep.subr.mxu0 0.0
      %1257 = vmatpush1.msra.mxu0 0.0
      %1258 = vmatprep.subr.mxu0 0.0
      %1259 = vmatpush1.msra.mxu0 0.0
      %1260 = vmatprep.subr.mxu0 0.0
      %1261 = vmatpush1.msra.mxu0 0.0
      %1262 = vmatprep.subr.mxu0 0.0
      %1263 = vmatpush1.msra.mxu0 0.0
      %1264 = vmatprep.subr.mxu0 0.0
      %1265 = vmatpush1.msra.mxu0 0.0
      %1266 = vmatprep.subr.mxu0 0.0
      %1267 = vmatpush1.msra.mxu0 0.0
      %1268 = vmatprep.subr.mxu0 0.0
      %1269 = vmatpush1.msra.mxu0 0.0
      %1270 = vmatprep.subr.mxu0 0.0
      %1271 = vmatpush1.msra.mxu0 0.0
      %1272 = vmatprep.subr.mxu0 0.0
      %1273 = vmatpush1.msra.mxu0 0.0
      %1274 = vmatprep.subr.mxu0 0.0
      %1275 = vmatpush1.msra.mxu0 0.0
      %1276 = vmatprep.subr.mxu0 0.0
      %1277 = vmatpush1.msra.mxu0 0.0
      %1278 = vmatprep.subr.mxu0 0.0
      %1279 = vmatpush1.msra.mxu0 0.0
      %1280 = vmatprep.subr.mxu0 0.0
      %1281 = vmatpush1.msra.mxu0 0.0
      %1282 = vmatprep.subr.mxu0 0.0
      %1283 = vmatpush1.msra.mxu0 0.0
      %1284 = vmatprep.subr.mxu0 0.0
      %1285 = vmatpush1.msra.mxu0 0.0
      %1286 = vmatprep.subr.mxu0 0.0
      %1287 = vmatpush1.msra.mxu0 0.0
      %1288 = vmatprep.subr.mxu0 0.0
      %1289 = vmatpush1.msra.mxu0 0.0
      %1290 = vmatprep.subr.mxu0 0.0
      %1291 = vmatpush1.msra.mxu0 0.0
      %1292 = vmatprep.subr.mxu0 0.0
      %1293 = vmatpush1.msra.mxu0 0.0
      %1294 = vmatprep.mubr.f32.mxu0 0.0
      %1295 = vmatmul.mubr.f32.gmra.mrb[0].mxu0 %v1219
      %v1296 = vpop.f32.mrb[0].mxu0
      %v1297 = vadd.f32 %v1200, %v1296
      %v1298 = vpop.f32.mrb[0].mxu0
      %1299 = vmatprep.mubr.f32.mxu0 0.0
      %1300 = vmatmul.mubr.f32.gmra.mrb[0].mxu0 %v1222
      %v1301 = vpop.f32.mrb[0].mxu0
      %v1302 = vadd.f32 %v1205, %v1301
      %v1303 = vpop.f32.mrb[0].mxu0
      %1304 = vmatprep.mubr.f32.mxu0 0.0
      %1305 = vmatmul.mubr.f32.gmra.mrb[0].mxu0 %v1225
      %v1306 = vpop.f32.mrb[0].mxu0
      %v1307 = vadd.f32 %v1210, %v1306
      %v1308 = vpop.f32.mrb[0].mxu0
      %1309 = vmatprep.mubr.f32.mxu0 0.0
      %1310 = vmatmul.mubr.f32.gmra.mrb[0].mxu0 %v1228
      %v1311 = vpop.f32.mrb[0].mxu0
      %v1312 = vadd.f32 %v1215, %v1311
      %v1313 = vpop.f32.mrb[0].mxu0
      %1314 = vdwg.mxu0
      %v1315 = vrot.slane %v1080, 1
      %v1316 = vrot.slane %v1081, 1
      %v1317 = vrot.slane %v1082, 1
      %v1318 = vrot.slane %v1083, 1
      %v1319 = vsel %vm601, %v1317, %v1318
      %v1320 = vsel %vm601, %v1316, %v1317
      %v1321 = vsel %vm601, %v1315, %v1316
      %v1322 = vsel %vm601, %v1318, %v1315
      %v1323 = vmul.f32 %v1321, %v377
      %v1324 = vmul.f32 %v1320, %v378
      %v1325 = vmul.f32 %v1319, %v379
      %v1326 = vmul.f32 %v1322, %v380
      %v1328 = vsel %vm762, %v1323, 0
      %v1331 = vsel %vm762, %v1324, 0
      %v1334 = vsel %vm762, %v1325, 0
      %v1337 = vsel %vm762, %v1326, 0
      %1339 = vmatprep.subr.mxu0 0.0
      %1340 = vmatpush1.msra.mxu0 %v1100
      %1341 = vmatprep.subr.mxu0 0.0
      %1342 = vmatpush1.msra.mxu0 %v1101
      %1343 = vmatprep.subr.mxu0 0.0
      %1344 = vmatpush1.msra.mxu0 %v1102
      %1345 = vmatprep.subr.mxu0 0.0
      %1346 = vmatpush1.msra.mxu0 %v1103
      %1347 = vmatprep.subr.mxu0 0.0
      %1348 = vmatpush1.msra.mxu0 %v1104
      %1349 = vmatprep.subr.mxu0 0.0
      %1350 = vmatpush1.msra.mxu0 %v1105
      %1351 = vmatprep.subr.mxu0 0.0
      %1352 = vmatpush1.msra.mxu0 %v1106
      %1353 = vmatprep.subr.mxu0 0.0
      %1354 = vmatpush1.msra.mxu0 %v1107
      %1355 = vmatprep.subr.mxu0 0.0
      %1356 = vmatpush1.msra.mxu0 0.0
      %1357 = vmatprep.subr.mxu0 0.0
      %1358 = vmatpush1.msra.mxu0 0.0
      %1359 = vmatprep.subr.mxu0 0.0
      %1360 = vmatpush1.msra.mxu0 0.0
      %1361 = vmatprep.subr.mxu0 0.0
      %1362 = vmatpush1.msra.mxu0 0.0
      %1363 = vmatprep.subr.mxu0 0.0
      %1364 = vmatpush1.msra.mxu0 0.0
      %1365 = vmatprep.subr.mxu0 0.0
      %1366 = vmatpush1.msra.mxu0 0.0
      %1367 = vmatprep.subr.mxu0 0.0
      %1368 = vmatpush1.msra.mxu0 0.0
      %1369 = vmatprep.subr.mxu0 0.0
      %1370 = vmatpush1.msra.mxu0 0.0
      %1371 = vmatprep.subr.mxu0 0.0
      %1372 = vmatpush1.msra.mxu0 0.0
      %1373 = vmatprep.subr.mxu0 0.0
      %1374 = vmatpush1.msra.mxu0 0.0
      %1375 = vmatprep.subr.mxu0 0.0
      %1376 = vmatpush1.msra.mxu0 0.0
      %1377 = vmatprep.subr.mxu0 0.0
      %1378 = vmatpush1.msra.mxu0 0.0
      %1379 = vmatprep.subr.mxu0 0.0
      %1380 = vmatpush1.msra.mxu0 0.0
      %1381 = vmatprep.subr.mxu0 0.0
      %1382 = vmatpush1.msra.mxu0 0.0
      %1383 = vmatprep.subr.mxu0 0.0
      %1384 = vmatpush1.msra.mxu0 0.0
      %1385 = vmatprep.subr.mxu0 0.0
      %1386 = vmatpush1.msra.mxu0 0.0
      %1387 = vmatprep.subr.mxu0 0.0
      %1388 = vmatpush1.msra.mxu0 0.0
      %1389 = vmatprep.subr.mxu0 0.0
      %1390 = vmatpush1.msra.mxu0 0.0
      %1391 = vmatprep.subr.mxu0 0.0
      %1392 = vmatpush1.msra.mxu0 0.0
      %1393 = vmatprep.subr.mxu0 0.0
      %1394 = vmatpush1.msra.mxu0 0.0
      %1395 = vmatprep.subr.mxu0 0.0
      %1396 = vmatpush1.msra.mxu0 0.0
      %1397 = vmatprep.subr.mxu0 0.0
      %1398 = vmatpush1.msra.mxu0 0.0
      %1399 = vmatprep.subr.mxu0 0.0
      %1400 = vmatpush1.msra.mxu0 0.0
      %1401 = vmatprep.subr.mxu0 0.0
      %1402 = vmatpush1.msra.mxu0 0.0
      %1403 = vmatprep.mubr.f32.mxu0 0.0
      %1404 = vmatmul.mubr.f32.gmra.mrb[0].mxu0 %v1328
      %v1405 = vpop.f32.mrb[0].mxu0
      %v1406 = vadd.f32 0.0, %v1405
      %v1407 = vpop.f32.mrb[0].mxu0
      %1408 = vmatprep.mubr.f32.mxu0 0.0
      %1409 = vmatmul.mubr.f32.gmra.mrb[0].mxu0 %v1331
      %v1410 = vpop.f32.mrb[0].mxu0
      %v1411 = vadd.f32 0.0, %v1410
      %v1412 = vpop.f32.mrb[0].mxu0
      %1413 = vmatprep.mubr.f32.mxu0 0.0
      %1414 = vmatmul.mubr.f32.gmra.mrb[0].mxu0 %v1334
      %v1415 = vpop.f32.mrb[0].mxu0
      %v1416 = vadd.f32 0.0, %v1415
      %v1417 = vpop.f32.mrb[0].mxu0
      %1418 = vmatprep.mubr.f32.mxu0 0.0
      %1419 = vmatmul.mubr.f32.gmra.mrb[0].mxu0 %v1337
      %v1420 = vpop.f32.mrb[0].mxu0
      %v1421 = vadd.f32 0.0, %v1420
      %v1422 = vpop.f32.mrb[0].mxu0
      %1423 = vdwg.mxu0
      %v1424 = vadd.f32 %v1297, %v1406
      %v1425 = vadd.f32 %v1302, %v1411
      %v1426 = vadd.f32 %v1307, %v1416
      %v1427 = vadd.f32 %v1312, %v1421
      %v1429 = vlaneseq
      %v1430 = vshrl.u32 %v1429, 7
      %v1431 = vsub.s32 0, %v1430
      %v1432 = vrot.slane %v1108, %v1431
      %v1434 = vadd.f32 %v1424, %v1432
      %v1435 = vadd.f32 %v1425, %v1432
      %v1436 = vadd.f32 %v1426, %v1432
      %v1437 = vadd.f32 %v1427, %v1432
      %v1438 = vmax.f32 %v1434, 0.0
      %v1439 = vmax.f32 %v1435, 0.0
      %v1440 = vmax.f32 %v1436, 0.0
      %v1441 = vmax.f32 %v1437, 0.0
      %v1442 = vld [vmem:[%s2 + $0x180] sm:$0xff]
      %v1443 = vld [vmem:[%s2 + $0x188] sm:$0xff]
      %v1444 = vld [vmem:[%s2 + $0x190] sm:$0xff]
      %v1445 = vld [vmem:[%s2 + $0x198] sm:$0xff]
      %v1446 = vld [vmem:[%s2 + $0x1a0] sm:$0xff]
      %v1447 = vld [vmem:[%s2 + $0x1a8] sm:$0xff]
      %v1448 = vld [vmem:[%s2 + $0x1b0] sm:$0xff]
      %v1449 = vld [vmem:[%s2 + $0x1b8] sm:$0xff]
      %v1450 = vld [vmem:[%s2 + $0x1c0] sm:$0xff]
      %v1451 = vld [vmem:[%s2 + $0x1c8] sm:$0xff]
      %v1452 = vld [vmem:[%s2 + $0x1d0] sm:$0xff]
      %v1453 = vld [vmem:[%s2 + $0x1d8] sm:$0xff]
      %v1454 = vld [vmem:[%s2 + $0x1e0] sm:$0xff]
      %v1455 = vld [vmem:[%s2 + $0x1e8] sm:$0xff]
      %v1456 = vld [vmem:[%s2 + $0x1f0] sm:$0xff]
      %v1457 = vld [vmem:[%s2 + $0x1f8] sm:$0xff]
      %v1458 = vld [vmem:[%s2 + $0x200] sm:$0xff]
      %v1459 = vld [vmem:[%s2 + $0x208] sm:$0xff]
      %v1460 = vld [vmem:[%s2 + $0x210] sm:$0xff]
      %v1461 = vld [vmem:[%s2 + $0x218] sm:$0xff]
      %v1462 = vld [vmem:[%s2 + $0x220] sm:$0xff]
      %v1463 = vld [vmem:[%s2 + $0x228] sm:$0xff]
      %v1464 = vld [vmem:[%s2 + $0x230] sm:$0xff]
      %v1465 = vld [vmem:[%s2 + $0x238] sm:$0xff]
      %v1466 = vld [vmem:[%s7] sm:$0x1]
      %v1467 = vrot.slane %v1438, 7
      %v1468 = vrot.slane %v1439, 7
      %v1469 = vrot.slane %v1440, 7
      %v1470 = vrot.slane %v1441, 7
      %v1471 = vsel %vm393, %v1469, %v1470
      %v1472 = vsel %vm393, %v1468, %v1469
      %v1473 = vsel %vm393, %v1467, %v1468
      %v1474 = vsel %vm393, %v1470, %v1467
      %v1475 = vmul.f32 %v1474, %v373
      %v1476 = vmul.f32 %v1473, %v374
      %v1477 = vmul.f32 %v1472, %v375
      %v1478 = vmul.f32 %v1471, %v376
      %v1480 = vsel %vm762, %v1475, 0
      %v1483 = vsel %vm762, %v1476, 0
      %v1486 = vsel %vm762, %v1477, 0
      %v1489 = vsel %vm762, %v1478, 0
      %1491 = vmatprep.subr.mxu0 0.0
      %1492 = vmatpush1.msra.mxu0 %v1450
      %1493 = vmatprep.subr.mxu0 0.0
      %1494 = vmatpush1.msra.mxu0 %v1451
      %1495 = vmatprep.subr.mxu0 0.0
      %1496 = vmatpush1.msra.mxu0 %v1452
      %1497 = vmatprep.subr.mxu0 0.0
      %1498 = vmatpush1.msra.mxu0 %v1453
      %1499 = vmatprep.subr.mxu0 0.0
      %1500 = vmatpush1.msra.mxu0 %v1454
      %1501 = vmatprep.subr.mxu0 0.0
      %1502 = vmatpush1.msra.mxu0 %v1455
      %1503 = vmatprep.subr.mxu0 0.0
      %1504 = vmatpush1.msra.mxu0 %v1456
      %1505 = vmatprep.subr.mxu0 0.0
      %1506 = vmatpush1.msra.mxu0 %v1457
      %1507 = vmatprep.subr.mxu0 0.0
      %1508 = vmatpush1.msra.mxu0 0.0
      %1509 = vmatprep.subr.mxu0 0.0
      %1510 = vmatpush1.msra.mxu0 0.0
      %1511 = vmatprep.subr.mxu0 0.0
      %1512 = vmatpush1.msra.mxu0 0.0
      %1513 = vmatprep.subr.mxu0 0.0
      %1514 = vmatpush1.msra.mxu0 0.0
      %1515 = vmatprep.subr.mxu0 0.0
      %1516 = vmatpush1.msra.mxu0 0.0
      %1517 = vmatprep.subr.mxu0 0.0
      %1518 = vmatpush1.msra.mxu0 0.0
      %1519 = vmatprep.subr.mxu0 0.0
      %1520 = vmatpush1.msra.mxu0 0.0
      %1521 = vmatprep.subr.mxu0 0.0
      %1522 = vmatpush1.msra.mxu0 0.0
      %1523 = vmatprep.subr.mxu0 0.0
      %1524 = vmatpush1.msra.mxu0 0.0
      %1525 = vmatprep.subr.mxu0 0.0
      %1526 = vmatpush1.msra.mxu0 0.0
      %1527 = vmatprep.subr.mxu0 0.0
      %1528 = vmatpush1.msra.mxu0 0.0
      %1529 = vmatprep.subr.mxu0 0.0
      %1530 = vmatpush1.msra.mxu0 0.0
      %1531 = vmatprep.subr.mxu0 0.0
      %1532 = vmatpush1.msra.mxu0 0.0
      %1533 = vmatprep.subr.mxu0 0.0
      %1534 = vmatpush1.msra.mxu0 0.0
      %1535 = vmatprep.subr.mxu0 0.0
      %1536 = vmatpush1.msra.mxu0 0.0
      %1537 = vmatprep.subr.mxu0 0.0
      %1538 = vmatpush1.msra.mxu0 0.0
      %1539 = vmatprep.subr.mxu0 0.0
      %1540 = vmatpush1.msra.mxu0 0.0
      %1541 = vmatprep.subr.mxu0 0.0
      %1542 = vmatpush1.msra.mxu0 0.0
      %1543 = vmatprep.subr.mxu0 0.0
      %1544 = vmatpush1.msra.mxu0 0.0
      %1545 = vmatprep.subr.mxu0 0.0
      %1546 = vmatpush1.msra.mxu0 0.0
      %1547 = vmatprep.subr.mxu0 0.0
      %1548 = vmatpush1.msra.mxu0 0.0
      %1549 = vmatprep.subr.mxu0 0.0
      %1550 = vmatpush1.msra.mxu0 0.0
      %1551 = vmatprep.subr.mxu0 0.0
      %1552 = vmatpush1.msra.mxu0 0.0
      %1553 = vmatprep.subr.mxu0 0.0
      %1554 = vmatpush1.msra.mxu0 0.0
      %1555 = vmatprep.mubr.f32.mxu0 0.0
      %1556 = vmatmul.mubr.f32.gmra.mrb[0].mxu0 %v1480
      %v1557 = vpop.f32.mrb[0].mxu0
      %v1558 = vadd.f32 0.0, %v1557
      %v1559 = vpop.f32.mrb[0].mxu0
      %1560 = vmatprep.mubr.f32.mxu0 0.0
      %1561 = vmatmul.mubr.f32.gmra.mrb[0].mxu0 %v1483
      %v1562 = vpop.f32.mrb[0].mxu0
      %v1563 = vadd.f32 0.0, %v1562
      %v1564 = vpop.f32.mrb[0].mxu0
      %1565 = vmatprep.mubr.f32.mxu0 0.0
      %1566 = vmatmul.mubr.f32.gmra.mrb[0].mxu0 %v1486
      %v1567 = vpop.f32.mrb[0].mxu0
      %v1568 = vadd.f32 0.0, %v1567
      %v1569 = vpop.f32.mrb[0].mxu0
      %1570 = vmatprep.mubr.f32.mxu0 0.0
      %1571 = vmatmul.mubr.f32.gmra.mrb[0].mxu0 %v1489
      %v1572 = vpop.f32.mrb[0].mxu0
      %v1573 = vadd.f32 0.0, %v1572
      %v1574 = vpop.f32.mrb[0].mxu0
      %1575 = vdwg.mxu0
      %v1577 = vsel %vm762, %v1438, 0
      %v1580 = vsel %vm762, %v1439, 0
      %v1583 = vsel %vm762, %v1440, 0
      %v1586 = vsel %vm762, %v1441, 0
      %1588 = vmatprep.subr.mxu0 0.0
      %1589 = vmatpush1.msra.mxu0 %v1442
      %1590 = vmatprep.subr.mxu0 0.0
      %1591 = vmatpush1.msra.mxu0 %v1443
      %1592 = vmatprep.subr.mxu0 0.0
      %1593 = vmatpush1.msra.mxu0 %v1444
      %1594 = vmatprep.subr.mxu0 0.0
      %1595 = vmatpush1.msra.mxu0 %v1445
      %1596 = vmatprep.subr.mxu0 0.0
      %1597 = vmatpush1.msra.mxu0 %v1446
      %1598 = vmatprep.subr.mxu0 0.0
      %1599 = vmatpush1.msra.mxu0 %v1447
      %1600 = vmatprep.subr.mxu0 0.0
      %1601 = vmatpush1.msra.mxu0 %v1448
      %1602 = vmatprep.subr.mxu0 0.0
      %1603 = vmatpush1.msra.mxu0 %v1449
      %1604 = vmatprep.subr.mxu0 0.0
      %1605 = vmatpush1.msra.mxu0 0.0
      %1606 = vmatprep.subr.mxu0 0.0
      %1607 = vmatpush1.msra.mxu0 0.0
      %1608 = vmatprep.subr.mxu0 0.0
      %1609 = vmatpush1.msra.mxu0 0.0
      %1610 = vmatprep.subr.mxu0 0.0
      %1611 = vmatpush1.msra.mxu0 0.0
      %1612 = vmatprep.subr.mxu0 0.0
      %1613 = vmatpush1.msra.mxu0 0.0
      %1614 = vmatprep.subr.mxu0 0.0
      %1615 = vmatpush1.msra.mxu0 0.0
      %1616 = vmatprep.subr.mxu0 0.0
      %1617 = vmatpush1.msra.mxu0 0.0
      %1618 = vmatprep.subr.mxu0 0.0
      %1619 = vmatpush1.msra.mxu0 0.0
      %1620 = vmatprep.subr.mxu0 0.0
      %1621 = vmatpush1.msra.mxu0 0.0
      %1622 = vmatprep.subr.mxu0 0.0
      %1623 = vmatpush1.msra.mxu0 0.0
      %1624 = vmatprep.subr.mxu0 0.0
      %1625 = vmatpush1.msra.mxu0 0.0
      %1626 = vmatprep.subr.mxu0 0.0
      %1627 = vmatpush1.msra.mxu0 0.0
      %1628 = vmatprep.subr.mxu0 0.0
      %1629 = vmatpush1.msra.mxu0 0.0
      %1630 = vmatprep.subr.mxu0 0.0
      %1631 = vmatpush1.msra.mxu0 0.0
      %1632 = vmatprep.subr.mxu0 0.0
      %1633 = vmatpush1.msra.mxu0 0.0
      %1634 = vmatprep.subr.mxu0 0.0
      %1635 = vmatpush1.msra.mxu0 0.0
      %1636 = vmatprep.subr.mxu0 0.0
      %1637 = vmatpush1.msra.mxu0 0.0
      %1638 = vmatprep.subr.mxu0 0.0
      %1639 = vmatpush1.msra.mxu0 0.0
      %1640 = vmatprep.subr.mxu0 0.0
      %1641 = vmatpush1.msra.mxu0 0.0
      %1642 = vmatprep.subr.mxu0 0.0
      %1643 = vmatpush1.msra.mxu0 0.0
      %1644 = vmatprep.subr.mxu0 0.0
      %1645 = vmatpush1.msra.mxu0 0.0
      %1646 = vmatprep.subr.mxu0 0.0
      %1647 = vmatpush1.msra.mxu0 0.0
      %1648 = vmatprep.subr.mxu0 0.0
      %1649 = vmatpush1.msra.mxu0 0.0
      %1650 = vmatprep.subr.mxu0 0.0
      %1651 = vmatpush1.msra.mxu0 0.0
      %1652 = vmatprep.mubr.f32.mxu0 0.0
      %1653 = vmatmul.mubr.f32.gmra.mrb[0].mxu0 %v1577
      %v1654 = vpop.f32.mrb[0].mxu0
      %v1655 = vadd.f32 %v1558, %v1654
      %v1656 = vpop.f32.mrb[0].mxu0
      %1657 = vmatprep.mubr.f32.mxu0 0.0
      %1658 = vmatmul.mubr.f32.gmra.mrb[0].mxu0 %v1580
      %v1659 = vpop.f32.mrb[0].mxu0
      %v1660 = vadd.f32 %v1563, %v1659
      %v1661 = vpop.f32.mrb[0].mxu0
      %1662 = vmatprep.mubr.f32.mxu0 0.0
      %1663 = vmatmul.mubr.f32.gmra.mrb[0].mxu0 %v1583
      %v1664 = vpop.f32.mrb[0].mxu0
      %v1665 = vadd.f32 %v1568, %v1664
      %v1666 = vpop.f32.mrb[0].mxu0
      %1667 = vmatprep.mubr.f32.mxu0 0.0
      %1668 = vmatmul.mubr.f32.gmra.mrb[0].mxu0 %v1586
      %v1669 = vpop.f32.mrb[0].mxu0
      %v1670 = vadd.f32 %v1573, %v1669
      %v1671 = vpop.f32.mrb[0].mxu0
      %1672 = vdwg.mxu0
      %v1673 = vrot.slane %v1438, 1
      %v1674 = vrot.slane %v1439, 1
      %v1675 = vrot.slane %v1440, 1
      %v1676 = vrot.slane %v1441, 1
      %v1677 = vsel %vm601, %v1675, %v1676
      %v1678 = vsel %vm601, %v1674, %v1675
      %v1679 = vsel %vm601, %v1673, %v1674
      %v1680 = vsel %vm601, %v1676, %v1673
      %v1681 = vmul.f32 %v1679, %v377
      %v1682 = vmul.f32 %v1678, %v378
      %v1683 = vmul.f32 %v1677, %v379
      %v1684 = vmul.f32 %v1680, %v380
      %v1686 = vsel %vm762, %v1681, 0
      %v1689 = vsel %vm762, %v1682, 0
      %v1692 = vsel %vm762, %v1683, 0
      %v1695 = vsel %vm762, %v1684, 0
      %1697 = vmatprep.subr.mxu0 0.0
      %1698 = vmatpush1.msra.mxu0 %v1458
      %1699 = vmatprep.subr.mxu0 0.0
      %1700 = vmatpush1.msra.mxu0 %v1459
      %1701 = vmatprep.subr.mxu0 0.0
      %1702 = vmatpush1.msra.mxu0 %v1460
      %1703 = vmatprep.subr.mxu0 0.0
      %1704 = vmatpush1.msra.mxu0 %v1461
      %1705 = vmatprep.subr.mxu0 0.0
      %1706 = vmatpush1.msra.mxu0 %v1462
      %1707 = vmatprep.subr.mxu0 0.0
      %1708 = vmatpush1.msra.mxu0 %v1463
      %1709 = vmatprep.subr.mxu0 0.0
      %1710 = vmatpush1.msra.mxu0 %v1464
      %1711 = vmatprep.subr.mxu0 0.0
      %1712 = vmatpush1.msra.mxu0 %v1465
      %1713 = vmatprep.subr.mxu0 0.0
      %1714 = vmatpush1.msra.mxu0 0.0
      %1715 = vmatprep.subr.mxu0 0.0
      %1716 = vmatpush1.msra.mxu0 0.0
      %1717 = vmatprep.subr.mxu0 0.0
      %1718 = vmatpush1.msra.mxu0 0.0
      %1719 = vmatprep.subr.mxu0 0.0
      %1720 = vmatpush1.msra.mxu0 0.0
      %1721 = vmatprep.subr.mxu0 0.0
      %1722 = vmatpush1.msra.mxu0 0.0
      %1723 = vmatprep.subr.mxu0 0.0
      %1724 = vmatpush1.msra.mxu0 0.0
      %1725 = vmatprep.subr.mxu0 0.0
      %1726 = vmatpush1.msra.mxu0 0.0
      %1727 = vmatprep.subr.mxu0 0.0
      %1728 = vmatpush1.msra.mxu0 0.0
      %1729 = vmatprep.subr.mxu0 0.0
      %1730 = vmatpush1.msra.mxu0 0.0
      %1731 = vmatprep.subr.mxu0 0.0
      %1732 = vmatpush1.msra.mxu0 0.0
      %1733 = vmatprep.subr.mxu0 0.0
      %1734 = vmatpush1.msra.mxu0 0.0
      %1735 = vmatprep.subr.mxu0 0.0
      %1736 = vmatpush1.msra.mxu0 0.0
      %1737 = vmatprep.subr.mxu0 0.0
      %1738 = vmatpush1.msra.mxu0 0.0
      %1739 = vmatprep.subr.mxu0 0.0
      %1740 = vmatpush1.msra.mxu0 0.0
      %1741 = vmatprep.subr.mxu0 0.0
      %1742 = vmatpush1.msra.mxu0 0.0
      %1743 = vmatprep.subr.mxu0 0.0
      %1744 = vmatpush1.msra.mxu0 0.0
      %1745 = vmatprep.subr.mxu0 0.0
      %1746 = vmatpush1.msra.mxu0 0.0
      %1747 = vmatprep.subr.mxu0 0.0
      %1748 = vmatpush1.msra.mxu0 0.0
      %1749 = vmatprep.subr.mxu0 0.0
      %1750 = vmatpush1.msra.mxu0 0.0
      %1751 = vmatprep.subr.mxu0 0.0
      %1752 = vmatpush1.msra.mxu0 0.0
      %1753 = vmatprep.subr.mxu0 0.0
      %1754 = vmatpush1.msra.mxu0 0.0
      %1755 = vmatprep.subr.mxu0 0.0
      %1756 = vmatpush1.msra.mxu0 0.0
      %1757 = vmatprep.subr.mxu0 0.0
      %1758 = vmatpush1.msra.mxu0 0.0
      %1759 = vmatprep.subr.mxu0 0.0
      %1760 = vmatpush1.msra.mxu0 0.0
      %1761 = vmatprep.mubr.f32.mxu0 0.0
      %1762 = vmatmul.mubr.f32.gmra.mrb[0].mxu0 %v1686
      %v1763 = vpop.f32.mrb[0].mxu0
      %v1764 = vadd.f32 0.0, %v1763
      %v1765 = vpop.f32.mrb[0].mxu0
      %1766 = vmatprep.mubr.f32.mxu0 0.0
      %1767 = vmatmul.mubr.f32.gmra.mrb[0].mxu0 %v1689
      %v1768 = vpop.f32.mrb[0].mxu0
      %v1769 = vadd.f32 0.0, %v1768
      %v1770 = vpop.f32.mrb[0].mxu0
      %1771 = vmatprep.mubr.f32.mxu0 0.0
      %1772 = vmatmul.mubr.f32.gmra.mrb[0].mxu0 %v1692
      %v1773 = vpop.f32.mrb[0].mxu0
      %v1774 = vadd.f32 0.0, %v1773
      %v1775 = vpop.f32.mrb[0].mxu0
      %1776 = vmatprep.mubr.f32.mxu0 0.0
      %1777 = vmatmul.mubr.f32.gmra.mrb[0].mxu0 %v1695
      %v1778 = vpop.f32.mrb[0].mxu0
      %v1779 = vadd.f32 0.0, %v1778
      %v1780 = vpop.f32.mrb[0].mxu0
      %1781 = vdwg.mxu0
      %v1782 = vadd.f32 %v1655, %v1764
      %v1783 = vadd.f32 %v1660, %v1769
      %v1784 = vadd.f32 %v1665, %v1774
      %v1785 = vadd.f32 %v1670, %v1779
      %v1787 = vlaneseq
      %v1788 = vshrl.u32 %v1787, 7
      %v1789 = vsub.s32 0, %v1788
      %v1790 = vrot.slane %v1466, %v1789
      %v1792 = vadd.f32 %v1782, %v1790
      %v1793 = vadd.f32 %v1783, %v1790
      %v1794 = vadd.f32 %v1784, %v1790
      %v1795 = vadd.f32 %v1785, %v1790
      %v1796 = vmax.f32 %v1792, 0.0
      %v1797 = vmax.f32 %v1793, 0.0
      %v1798 = vmax.f32 %v1794, 0.0
      %v1799 = vmax.f32 %v1795, 0.0
      %v1800 = vld [vmem:[%s2 + $0x240] sm:$0xff]
      %v1801 = vld [vmem:[%s2 + $0x248] sm:$0xff]
      %v1802 = vld [vmem:[%s2 + $0x250] sm:$0xff]
      %v1803 = vld [vmem:[%s2 + $0x258] sm:$0xff]
      %v1804 = vld [vmem:[%s2 + $0x260] sm:$0xff]
      %v1805 = vld [vmem:[%s2 + $0x268] sm:$0xff]
      %v1806 = vld [vmem:[%s2 + $0x270] sm:$0xff]
      %v1807 = vld [vmem:[%s2 + $0x278] sm:$0xff]
      %v1808 = vld [vmem:[%s2 + $0x280] sm:$0xff]
      %v1809 = vld [vmem:[%s2 + $0x288] sm:$0xff]
      %v1810 = vld [vmem:[%s2 + $0x290] sm:$0xff]
      %v1811 = vld [vmem:[%s2 + $0x298] sm:$0xff]
      %v1812 = vld [vmem:[%s2 + $0x2a0] sm:$0xff]
      %v1813 = vld [vmem:[%s2 + $0x2a8] sm:$0xff]
      %v1814 = vld [vmem:[%s2 + $0x2b0] sm:$0xff]
      %v1815 = vld [vmem:[%s2 + $0x2b8] sm:$0xff]
      %v1816 = vld [vmem:[%s2 + $0x2c0] sm:$0xff]
      %v1817 = vld [vmem:[%s2 + $0x2c8] sm:$0xff]
      %v1818 = vld [vmem:[%s2 + $0x2d0] sm:$0xff]
      %v1819 = vld [vmem:[%s2 + $0x2d8] sm:$0xff]
      %v1820 = vld [vmem:[%s2 + $0x2e0] sm:$0xff]
      %v1821 = vld [vmem:[%s2 + $0x2e8] sm:$0xff]
      %v1822 = vld [vmem:[%s2 + $0x2f0] sm:$0xff]
      %v1823 = vld [vmem:[%s2 + $0x2f8] sm:$0xff]
      %v1824 = vld [vmem:[%s8] sm:$0x1]
      %v1825 = vrot.slane %v1796, 7
      %v1826 = vrot.slane %v1797, 7
      %v1827 = vrot.slane %v1798, 7
      %v1828 = vrot.slane %v1799, 7
      %v1829 = vsel %vm393, %v1827, %v1828
      %v1830 = vsel %vm393, %v1826, %v1827
      %v1831 = vsel %vm393, %v1825, %v1826
      %v1832 = vsel %vm393, %v1828, %v1825
      %v1833 = vmul.f32 %v1832, %v373
      %v1834 = vmul.f32 %v1831, %v374
      %v1835 = vmul.f32 %v1830, %v375
      %v1836 = vmul.f32 %v1829, %v376
      %v1838 = vsel %vm762, %v1833, 0
      %v1841 = vsel %vm762, %v1834, 0
      %v1844 = vsel %vm762, %v1835, 0
      %v1847 = vsel %vm762, %v1836, 0
      %1849 = vmatprep.subr.mxu0 0.0
      %1850 = vmatpush1.msra.mxu0 %v1808
      %1851 = vmatprep.subr.mxu0 0.0
      %1852 = vmatpush1.msra.mxu0 %v1809
      %1853 = vmatprep.subr.mxu0 0.0
      %1854 = vmatpush1.msra.mxu0 %v1810
      %1855 = vmatprep.subr.mxu0 0.0
      %1856 = vmatpush1.msra.mxu0 %v1811
      %1857 = vmatprep.subr.mxu0 0.0
      %1858 = vmatpush1.msra.mxu0 %v1812
      %1859 = vmatprep.subr.mxu0 0.0
      %1860 = vmatpush1.msra.mxu0 %v1813
      %1861 = vmatprep.subr.mxu0 0.0
      %1862 = vmatpush1.msra.mxu0 %v1814
      %1863 = vmatprep.subr.mxu0 0.0
      %1864 = vmatpush1.msra.mxu0 %v1815
      %1865 = vmatprep.subr.mxu0 0.0
      %1866 = vmatpush1.msra.mxu0 0.0
      %1867 = vmatprep.subr.mxu0 0.0
      %1868 = vmatpush1.msra.mxu0 0.0
      %1869 = vmatprep.subr.mxu0 0.0
      %1870 = vmatpush1.msra.mxu0 0.0
      %1871 = vmatprep.subr.mxu0 0.0
      %1872 = vmatpush1.msra.mxu0 0.0
      %1873 = vmatprep.subr.mxu0 0.0
      %1874 = vmatpush1.msra.mxu0 0.0
      %1875 = vmatprep.subr.mxu0 0.0
      %1876 = vmatpush1.msra.mxu0 0.0
      %1877 = vmatprep.subr.mxu0 0.0
      %1878 = vmatpush1.msra.mxu0 0.0
      %1879 = vmatprep.subr.mxu0 0.0
      %1880 = vmatpush1.msra.mxu0 0.0
      %1881 = vmatprep.subr.mxu0 0.0
      %1882 = vmatpush1.msra.mxu0 0.0
      %1883 = vmatprep.subr.mxu0 0.0
      %1884 = vmatpush1.msra.mxu0 0.0
      %1885 = vmatprep.subr.mxu0 0.0
      %1886 = vmatpush1.msra.mxu0 0.0
      %1887 = vmatprep.subr.mxu0 0.0
      %1888 = vmatpush1.msra.mxu0 0.0
      %1889 = vmatprep.subr.mxu0 0.0
      %1890 = vmatpush1.msra.mxu0 0.0
      %1891 = vmatprep.subr.mxu0 0.0
      %1892 = vmatpush1.msra.mxu0 0.0
      %1893 = vmatprep.subr.mxu0 0.0
      %1894 = vmatpush1.msra.mxu0 0.0
      %1895 = vmatprep.subr.mxu0 0.0
      %1896 = vmatpush1.msra.mxu0 0.0
      %1897 = vmatprep.subr.mxu0 0.0
      %1898 = vmatpush1.msra.mxu0 0.0
      %1899 = vmatprep.subr.mxu0 0.0
      %1900 = vmatpush1.msra.mxu0 0.0
      %1901 = vmatprep.subr.mxu0 0.0
      %1902 = vmatpush1.msra.mxu0 0.0
      %1903 = vmatprep.subr.mxu0 0.0
      %1904 = vmatpush1.msra.mxu0 0.0
      %1905 = vmatprep.subr.mxu0 0.0
      %1906 = vmatpush1.msra.mxu0 0.0
      %1907 = vmatprep.subr.mxu0 0.0
      %1908 = vmatpush1.msra.mxu0 0.0
      %1909 = vmatprep.subr.mxu0 0.0
      %1910 = vmatpush1.msra.mxu0 0.0
      %1911 = vmatprep.subr.mxu0 0.0
      %1912 = vmatpush1.msra.mxu0 0.0
      %1913 = vmatprep.mubr.f32.mxu0 0.0
      %1914 = vmatmul.mubr.f32.gmra.mrb[0].mxu0 %v1838
      %v1915 = vpop.f32.mrb[0].mxu0
      %v1916 = vadd.f32 0.0, %v1915
      %v1917 = vpop.f32.mrb[0].mxu0
      %1918 = vmatprep.mubr.f32.mxu0 0.0
      %1919 = vmatmul.mubr.f32.gmra.mrb[0].mxu0 %v1841
      %v1920 = vpop.f32.mrb[0].mxu0
      %v1921 = vadd.f32 0.0, %v1920
      %v1922 = vpop.f32.mrb[0].mxu0
      %1923 = vmatprep.mubr.f32.mxu0 0.0
      %1924 = vmatmul.mubr.f32.gmra.mrb[0].mxu0 %v1844
      %v1925 = vpop.f32.mrb[0].mxu0
      %v1926 = vadd.f32 0.0, %v1925
      %v1927 = vpop.f32.mrb[0].mxu0
      %1928 = vmatprep.mubr.f32.mxu0 0.0
      %1929 = vmatmul.mubr.f32.gmra.mrb[0].mxu0 %v1847
      %v1930 = vpop.f32.mrb[0].mxu0
      %v1931 = vadd.f32 0.0, %v1930
      %v1932 = vpop.f32.mrb[0].mxu0
      %1933 = vdwg.mxu0
      %v1935 = vsel %vm762, %v1796, 0
      %v1938 = vsel %vm762, %v1797, 0
      %v1941 = vsel %vm762, %v1798, 0
      %v1944 = vsel %vm762, %v1799, 0
      %1946 = vmatprep.subr.mxu0 0.0
      %1947 = vmatpush1.msra.mxu0 %v1800
      %1948 = vmatprep.subr.mxu0 0.0
      %1949 = vmatpush1.msra.mxu0 %v1801
      %1950 = vmatprep.subr.mxu0 0.0
      %1951 = vmatpush1.msra.mxu0 %v1802
      %1952 = vmatprep.subr.mxu0 0.0
      %1953 = vmatpush1.msra.mxu0 %v1803
      %1954 = vmatprep.subr.mxu0 0.0
      %1955 = vmatpush1.msra.mxu0 %v1804
      %1956 = vmatprep.subr.mxu0 0.0
      %1957 = vmatpush1.msra.mxu0 %v1805
      %1958 = vmatprep.subr.mxu0 0.0
      %1959 = vmatpush1.msra.mxu0 %v1806
      %1960 = vmatprep.subr.mxu0 0.0
      %1961 = vmatpush1.msra.mxu0 %v1807
      %1962 = vmatprep.subr.mxu0 0.0
      %1963 = vmatpush1.msra.mxu0 0.0
      %1964 = vmatprep.subr.mxu0 0.0
      %1965 = vmatpush1.msra.mxu0 0.0
      %1966 = vmatprep.subr.mxu0 0.0
      %1967 = vmatpush1.msra.mxu0 0.0
      %1968 = vmatprep.subr.mxu0 0.0
      %1969 = vmatpush1.msra.mxu0 0.0
      %1970 = vmatprep.subr.mxu0 0.0
      %1971 = vmatpush1.msra.mxu0 0.0
      %1972 = vmatprep.subr.mxu0 0.0
      %1973 = vmatpush1.msra.mxu0 0.0
      %1974 = vmatprep.subr.mxu0 0.0
      %1975 = vmatpush1.msra.mxu0 0.0
      %1976 = vmatprep.subr.mxu0 0.0
      %1977 = vmatpush1.msra.mxu0 0.0
      %1978 = vmatprep.subr.mxu0 0.0
      %1979 = vmatpush1.msra.mxu0 0.0
      %1980 = vmatprep.subr.mxu0 0.0
      %1981 = vmatpush1.msra.mxu0 0.0
      %1982 = vmatprep.subr.mxu0 0.0
      %1983 = vmatpush1.msra.mxu0 0.0
      %1984 = vmatprep.subr.mxu0 0.0
      %1985 = vmatpush1.msra.mxu0 0.0
      %1986 = vmatprep.subr.mxu0 0.0
      %1987 = vmatpush1.msra.mxu0 0.0
      %1988 = vmatprep.subr.mxu0 0.0
      %1989 = vmatpush1.msra.mxu0 0.0
      %1990 = vmatprep.subr.mxu0 0.0
      %1991 = vmatpush1.msra.mxu0 0.0
      %1992 = vmatprep.subr.mxu0 0.0
      %1993 = vmatpush1.msra.mxu0 0.0
      %1994 = vmatprep.subr.mxu0 0.0
      %1995 = vmatpush1.msra.mxu0 0.0
      %1996 = vmatprep.subr.mxu0 0.0
      %1997 = vmatpush1.msra.mxu0 0.0
      %1998 = vmatprep.subr.mxu0 0.0
      %1999 = vmatpush1.msra.mxu0 0.0
      %2000 = vmatprep.subr.mxu0 0.0
      %2001 = vmatpush1.msra.mxu0 0.0
      %2002 = vmatprep.subr.mxu0 0.0
      %2003 = vmatpush1.msra.mxu0 0.0
      %2004 = vmatprep.subr.mxu0 0.0
      %2005 = vmatpush1.msra.mxu0 0.0
      %2006 = vmatprep.subr.mxu0 0.0
      %2007 = vmatpush1.msra.mxu0 0.0
      %2008 = vmatprep.subr.mxu0 0.0
      %2009 = vmatpush1.msra.mxu0 0.0
      %2010 = vmatprep.mubr.f32.mxu0 0.0
      %2011 = vmatmul.mubr.f32.gmra.mrb[0].mxu0 %v1935
      %v2012 = vpop.f32.mrb[0].mxu0
      %v2013 = vadd.f32 %v1916, %v2012
      %v2014 = vpop.f32.mrb[0].mxu0
      %2015 = vmatprep.mubr.f32.mxu0 0.0
      %2016 = vmatmul.mubr.f32.gmra.mrb[0].mxu0 %v1938
      %v2017 = vpop.f32.mrb[0].mxu0
      %v2018 = vadd.f32 %v1921, %v2017
      %v2019 = vpop.f32.mrb[0].mxu0
      %2020 = vmatprep.mubr.f32.mxu0 0.0
      %2021 = vmatmul.mubr.f32.gmra.mrb[0].mxu0 %v1941
      %v2022 = vpop.f32.mrb[0].mxu0
      %v2023 = vadd.f32 %v1926, %v2022
      %v2024 = vpop.f32.mrb[0].mxu0
      %2025 = vmatprep.mubr.f32.mxu0 0.0
      %2026 = vmatmul.mubr.f32.gmra.mrb[0].mxu0 %v1944
      %v2027 = vpop.f32.mrb[0].mxu0
      %v2028 = vadd.f32 %v1931, %v2027
      %v2029 = vpop.f32.mrb[0].mxu0
      %2030 = vdwg.mxu0
      %v2031 = vrot.slane %v1796, 1
      %v2032 = vrot.slane %v1797, 1
      %v2033 = vrot.slane %v1798, 1
      %v2034 = vrot.slane %v1799, 1
      %v2035 = vsel %vm601, %v2033, %v2034
      %v2036 = vsel %vm601, %v2032, %v2033
      %v2037 = vsel %vm601, %v2031, %v2032
      %v2038 = vsel %vm601, %v2034, %v2031
      %v2039 = vmul.f32 %v2037, %v377
      %v2040 = vmul.f32 %v2036, %v378
      %v2041 = vmul.f32 %v2035, %v379
      %v2042 = vmul.f32 %v2038, %v380
      %v2044 = vsel %vm762, %v2039, 0
      %v2047 = vsel %vm762, %v2040, 0
      %v2050 = vsel %vm762, %v2041, 0
      %v2053 = vsel %vm762, %v2042, 0
      %2055 = vmatprep.subr.mxu0 0.0
      %2056 = vmatpush1.msra.mxu0 %v1816
      %2057 = vmatprep.subr.mxu0 0.0
      %2058 = vmatpush1.msra.mxu0 %v1817
      %2059 = vmatprep.subr.mxu0 0.0
      %2060 = vmatpush1.msra.mxu0 %v1818
      %2061 = vmatprep.subr.mxu0 0.0
      %2062 = vmatpush1.msra.mxu0 %v1819
      %2063 = vmatprep.subr.mxu0 0.0
      %2064 = vmatpush1.msra.mxu0 %v1820
      %2065 = vmatprep.subr.mxu0 0.0
      %2066 = vmatpush1.msra.mxu0 %v1821
      %2067 = vmatprep.subr.mxu0 0.0
      %2068 = vmatpush1.msra.mxu0 %v1822
      %2069 = vmatprep.subr.mxu0 0.0
      %2070 = vmatpush1.msra.mxu0 %v1823
      %2071 = vmatprep.subr.mxu0 0.0
      %2072 = vmatpush1.msra.mxu0 0.0
      %2073 = vmatprep.subr.mxu0 0.0
      %2074 = vmatpush1.msra.mxu0 0.0
      %2075 = vmatprep.subr.mxu0 0.0
      %2076 = vmatpush1.msra.mxu0 0.0
      %2077 = vmatprep.subr.mxu0 0.0
      %2078 = vmatpush1.msra.mxu0 0.0
      %2079 = vmatprep.subr.mxu0 0.0
      %2080 = vmatpush1.msra.mxu0 0.0
      %2081 = vmatprep.subr.mxu0 0.0
      %2082 = vmatpush1.msra.mxu0 0.0
      %2083 = vmatprep.subr.mxu0 0.0
      %2084 = vmatpush1.msra.mxu0 0.0
      %2085 = vmatprep.subr.mxu0 0.0
      %2086 = vmatpush1.msra.mxu0 0.0
      %2087 = vmatprep.subr.mxu0 0.0
      %2088 = vmatpush1.msra.mxu0 0.0
      %2089 = vmatprep.subr.mxu0 0.0
      %2090 = vmatpush1.msra.mxu0 0.0
      %2091 = vmatprep.subr.mxu0 0.0
      %2092 = vmatpush1.msra.mxu0 0.0
      %2093 = vmatprep.subr.mxu0 0.0
      %2094 = vmatpush1.msra.mxu0 0.0
      %2095 = vmatprep.subr.mxu0 0.0
      %2096 = vmatpush1.msra.mxu0 0.0
      %2097 = vmatprep.subr.mxu0 0.0
      %2098 = vmatpush1.msra.mxu0 0.0
      %2099 = vmatprep.subr.mxu0 0.0
      %2100 = vmatpush1.msra.mxu0 0.0
      %2101 = vmatprep.subr.mxu0 0.0
      %2102 = vmatpush1.msra.mxu0 0.0
      %2103 = vmatprep.subr.mxu0 0.0
      %2104 = vmatpush1.msra.mxu0 0.0
      %2105 = vmatprep.subr.mxu0 0.0
      %2106 = vmatpush1.msra.mxu0 0.0
      %2107 = vmatprep.subr.mxu0 0.0
      %2108 = vmatpush1.msra.mxu0 0.0
      %2109 = vmatprep.subr.mxu0 0.0
      %2110 = vmatpush1.msra.mxu0 0.0
      %2111 = vmatprep.subr.mxu0 0.0
      %2112 = vmatpush1.msra.mxu0 0.0
      %2113 = vmatprep.subr.mxu0 0.0
      %2114 = vmatpush1.msra.mxu0 0.0
      %2115 = vmatprep.subr.mxu0 0.0
      %2116 = vmatpush1.msra.mxu0 0.0
      %2117 = vmatprep.subr.mxu0 0.0
      %2118 = vmatpush1.msra.mxu0 0.0
      %2119 = vmatprep.mubr.f32.mxu0 0.0
      %2120 = vmatmul.mubr.f32.gmra.mrb[0].mxu0 %v2044
      %v2121 = vpop.f32.mrb[0].mxu0
      %v2122 = vadd.f32 0.0, %v2121
      %v2123 = vpop.f32.mrb[0].mxu0
      %2124 = vmatprep.mubr.f32.mxu0 0.0
      %2125 = vmatmul.mubr.f32.gmra.mrb[0].mxu0 %v2047
      %v2126 = vpop.f32.mrb[0].mxu0
      %v2127 = vadd.f32 0.0, %v2126
      %v2128 = vpop.f32.mrb[0].mxu0
      %2129 = vmatprep.mubr.f32.mxu0 0.0
      %2130 = vmatmul.mubr.f32.gmra.mrb[0].mxu0 %v2050
      %v2131 = vpop.f32.mrb[0].mxu0
      %v2132 = vadd.f32 0.0, %v2131
      %v2133 = vpop.f32.mrb[0].mxu0
      %2134 = vmatprep.mubr.f32.mxu0 0.0
      %2135 = vmatmul.mubr.f32.gmra.mrb[0].mxu0 %v2053
      %v2136 = vpop.f32.mrb[0].mxu0
      %v2137 = vadd.f32 0.0, %v2136
      %v2138 = vpop.f32.mrb[0].mxu0
      %2139 = vdwg.mxu0
      %v2140 = vadd.f32 %v2013, %v2122
      %v2141 = vadd.f32 %v2018, %v2127
      %v2142 = vadd.f32 %v2023, %v2132
      %v2143 = vadd.f32 %v2028, %v2137
      %v2145 = vlaneseq
      %v2146 = vshrl.u32 %v2145, 7
      %v2147 = vsub.s32 0, %v2146
      %v2148 = vrot.slane %v1824, %v2147
      %v2150 = vadd.f32 %v2140, %v2148
      %v2151 = vadd.f32 %v2141, %v2148
      %v2152 = vadd.f32 %v2142, %v2148
      %v2153 = vadd.f32 %v2143, %v2148
      %v2154 = vmax.f32 %v2150, 0.0
      %v2155 = vmax.f32 %v2151, 0.0
      %v2156 = vmax.f32 %v2152, 0.0
      %v2157 = vmax.f32 %v2153, 0.0
      %v2158 = vld [vmem:[%s3] sm:$0xff]
      %v2159 = vld [vmem:[%s3 + $0x8] sm:$0xff]
      %v2160 = vld [vmem:[%s3 + $0x10] sm:$0xff]
      %v2161 = vld [vmem:[%s3 + $0x18] sm:$0xff]
      %v2162 = vld [vmem:[%s3 + $0x20] sm:$0xff]
      %v2163 = vld [vmem:[%s3 + $0x28] sm:$0xff]
      %v2164 = vld [vmem:[%s3 + $0x30] sm:$0xff]
      %v2165 = vld [vmem:[%s3 + $0x38] sm:$0xff]
      %v2166 = vld [vmem:[%s3 + $0x40] sm:$0xff]
      %v2167 = vld [vmem:[%s3 + $0x48] sm:$0xff]
      %v2168 = vld [vmem:[%s3 + $0x50] sm:$0xff]
      %v2169 = vld [vmem:[%s3 + $0x58] sm:$0xff]
      %v2170 = vld [vmem:[%s3 + $0x60] sm:$0xff]
      %v2171 = vld [vmem:[%s3 + $0x68] sm:$0xff]
      %v2172 = vld [vmem:[%s3 + $0x70] sm:$0xff]
      %v2173 = vld [vmem:[%s3 + $0x78] sm:$0xff]
      %v2174 = vld [vmem:[%s3 + $0x80] sm:$0xff]
      %v2175 = vld [vmem:[%s3 + $0x88] sm:$0xff]
      %v2176 = vld [vmem:[%s3 + $0x90] sm:$0xff]
      %v2177 = vld [vmem:[%s3 + $0x98] sm:$0xff]
      %v2178 = vld [vmem:[%s3 + $0xa0] sm:$0xff]
      %v2179 = vld [vmem:[%s3 + $0xa8] sm:$0xff]
      %v2180 = vld [vmem:[%s3 + $0xb0] sm:$0xff]
      %v2181 = vld [vmem:[%s3 + $0xb8] sm:$0xff]
      %v2182 = vld [vmem:[%s9] sm:$0x1]
      %v2183 = vrot.slane %v2154, 7
      %v2184 = vrot.slane %v2155, 7
      %v2185 = vrot.slane %v2156, 7
      %v2186 = vrot.slane %v2157, 7
      %v2187 = vsel %vm393, %v2185, %v2186
      %v2188 = vsel %vm393, %v2184, %v2185
      %v2189 = vsel %vm393, %v2183, %v2184
      %v2190 = vsel %vm393, %v2186, %v2183
      %v2191 = vmul.f32 %v2190, %v373
      %v2192 = vmul.f32 %v2189, %v374
      %v2193 = vmul.f32 %v2188, %v375
      %v2194 = vmul.f32 %v2187, %v376
      %v2196 = vsel %vm762, %v2191, 0
      %v2199 = vsel %vm762, %v2192, 0
      %v2202 = vsel %vm762, %v2193, 0
      %v2205 = vsel %vm762, %v2194, 0
      %2207 = vmatprep.subr.mxu0 0.0
      %2208 = vmatpush1.msra.mxu0 %v2166
      %2209 = vmatprep.subr.mxu0 0.0
      %2210 = vmatpush1.msra.mxu0 %v2167
      %2211 = vmatprep.subr.mxu0 0.0
      %2212 = vmatpush1.msra.mxu0 %v2168
      %2213 = vmatprep.subr.mxu0 0.0
      %2214 = vmatpush1.msra.mxu0 %v2169
      %2215 = vmatprep.subr.mxu0 0.0
      %2216 = vmatpush1.msra.mxu0 %v2170
      %2217 = vmatprep.subr.mxu0 0.0
      %2218 = vmatpush1.msra.mxu0 %v2171
      %2219 = vmatprep.subr.mxu0 0.0
      %2220 = vmatpush1.msra.mxu0 %v2172
      %2221 = vmatprep.subr.mxu0 0.0
      %2222 = vmatpush1.msra.mxu0 %v2173
      %2223 = vmatprep.subr.mxu0 0.0
      %2224 = vmatpush1.msra.mxu0 0.0
      %2225 = vmatprep.subr.mxu0 0.0
      %2226 = vmatpush1.msra.mxu0 0.0
      %2227 = vmatprep.subr.mxu0 0.0
      %2228 = vmatpush1.msra.mxu0 0.0
      %2229 = vmatprep.subr.mxu0 0.0
      %2230 = vmatpush1.msra.mxu0 0.0
      %2231 = vmatprep.subr.mxu0 0.0
      %2232 = vmatpush1.msra.mxu0 0.0
      %2233 = vmatprep.subr.mxu0 0.0
      %2234 = vmatpush1.msra.mxu0 0.0
      %2235 = vmatprep.subr.mxu0 0.0
      %2236 = vmatpush1.msra.mxu0 0.0
      %2237 = vmatprep.subr.mxu0 0.0
      %2238 = vmatpush1.msra.mxu0 0.0
      %2239 = vmatprep.subr.mxu0 0.0
      %2240 = vmatpush1.msra.mxu0 0.0
      %2241 = vmatprep.subr.mxu0 0.0
      %2242 = vmatpush1.msra.mxu0 0.0
      %2243 = vmatprep.subr.mxu0 0.0
      %2244 = vmatpush1.msra.mxu0 0.0
      %2245 = vmatprep.subr.mxu0 0.0
      %2246 = vmatpush1.msra.mxu0 0.0
      %2247 = vmatprep.subr.mxu0 0.0
      %2248 = vmatpush1.msra.mxu0 0.0
      %2249 = vmatprep.subr.mxu0 0.0
      %2250 = vmatpush1.msra.mxu0 0.0
      %2251 = vmatprep.subr.mxu0 0.0
      %2252 = vmatpush1.msra.mxu0 0.0
      %2253 = vmatprep.subr.mxu0 0.0
      %2254 = vmatpush1.msra.mxu0 0.0
      %2255 = vmatprep.subr.mxu0 0.0
      %2256 = vmatpush1.msra.mxu0 0.0
      %2257 = vmatprep.subr.mxu0 0.0
      %2258 = vmatpush1.msra.mxu0 0.0
      %2259 = vmatprep.subr.mxu0 0.0
      %2260 = vmatpush1.msra.mxu0 0.0
      %2261 = vmatprep.subr.mxu0 0.0
      %2262 = vmatpush1.msra.mxu0 0.0
      %2263 = vmatprep.subr.mxu0 0.0
      %2264 = vmatpush1.msra.mxu0 0.0
      %2265 = vmatprep.subr.mxu0 0.0
      %2266 = vmatpush1.msra.mxu0 0.0
      %2267 = vmatprep.subr.mxu0 0.0
      %2268 = vmatpush1.msra.mxu0 0.0
      %2269 = vmatprep.subr.mxu0 0.0
      %2270 = vmatpush1.msra.mxu0 0.0
      %2271 = vmatprep.mubr.f32.mxu0 0.0
      %2272 = vmatmul.mubr.f32.gmra.mrb[0].mxu0 %v2196
      %v2273 = vpop.f32.mrb[0].mxu0
      %v2274 = vadd.f32 0.0, %v2273
      %v2275 = vpop.f32.mrb[0].mxu0
      %2276 = vmatprep.mubr.f32.mxu0 0.0
      %2277 = vmatmul.mubr.f32.gmra.mrb[0].mxu0 %v2199
      %v2278 = vpop.f32.mrb[0].mxu0
      %v2279 = vadd.f32 0.0, %v2278
      %v2280 = vpop.f32.mrb[0].mxu0
      %2281 = vmatprep.mubr.f32.mxu0 0.0
      %2282 = vmatmul.mubr.f32.gmra.mrb[0].mxu0 %v2202
      %v2283 = vpop.f32.mrb[0].mxu0
      %v2284 = vadd.f32 0.0, %v2283
      %v2285 = vpop.f32.mrb[0].mxu0
      %2286 = vmatprep.mubr.f32.mxu0 0.0
      %2287 = vmatmul.mubr.f32.gmra.mrb[0].mxu0 %v2205
      %v2288 = vpop.f32.mrb[0].mxu0
      %v2289 = vadd.f32 0.0, %v2288
      %v2290 = vpop.f32.mrb[0].mxu0
      %2291 = vdwg.mxu0
      %v2293 = vsel %vm762, %v2154, 0
      %v2296 = vsel %vm762, %v2155, 0
      %v2299 = vsel %vm762, %v2156, 0
      %v2302 = vsel %vm762, %v2157, 0
      %2304 = vmatprep.subr.mxu0 0.0
      %2305 = vmatpush1.msra.mxu0 %v2158
      %2306 = vmatprep.subr.mxu0 0.0
      %2307 = vmatpush1.msra.mxu0 %v2159
      %2308 = vmatprep.subr.mxu0 0.0
      %2309 = vmatpush1.msra.mxu0 %v2160
      %2310 = vmatprep.subr.mxu0 0.0
      %2311 = vmatpush1.msra.mxu0 %v2161
      %2312 = vmatprep.subr.mxu0 0.0
      %2313 = vmatpush1.msra.mxu0 %v2162
      %2314 = vmatprep.subr.mxu0 0.0
      %2315 = vmatpush1.msra.mxu0 %v2163
      %2316 = vmatprep.subr.mxu0 0.0
      %2317 = vmatpush1.msra.mxu0 %v2164
      %2318 = vmatprep.subr.mxu0 0.0
      %2319 = vmatpush1.msra.mxu0 %v2165
      %2320 = vmatprep.subr.mxu0 0.0
      %2321 = vmatpush1.msra.mxu0 0.0
      %2322 = vmatprep.subr.mxu0 0.0
      %2323 = vmatpush1.msra.mxu0 0.0
      %2324 = vmatprep.subr.mxu0 0.0
      %2325 = vmatpush1.msra.mxu0 0.0
      %2326 = vmatprep.subr.mxu0 0.0
      %2327 = vmatpush1.msra.mxu0 0.0
      %2328 = vmatprep.subr.mxu0 0.0
      %2329 = vmatpush1.msra.mxu0 0.0
      %2330 = vmatprep.subr.mxu0 0.0
      %2331 = vmatpush1.msra.mxu0 0.0
      %2332 = vmatprep.subr.mxu0 0.0
      %2333 = vmatpush1.msra.mxu0 0.0
      %2334 = vmatprep.subr.mxu0 0.0
      %2335 = vmatpush1.msra.mxu0 0.0
      %2336 = vmatprep.subr.mxu0 0.0
      %2337 = vmatpush1.msra.mxu0 0.0
      %2338 = vmatprep.subr.mxu0 0.0
      %2339 = vmatpush1.msra.mxu0 0.0
      %2340 = vmatprep.subr.mxu0 0.0
      %2341 = vmatpush1.msra.mxu0 0.0
      %2342 = vmatprep.subr.mxu0 0.0
      %2343 = vmatpush1.msra.mxu0 0.0
      %2344 = vmatprep.subr.mxu0 0.0
      %2345 = vmatpush1.msra.mxu0 0.0
      %2346 = vmatprep.subr.mxu0 0.0
      %2347 = vmatpush1.msra.mxu0 0.0
      %2348 = vmatprep.subr.mxu0 0.0
      %2349 = vmatpush1.msra.mxu0 0.0
      %2350 = vmatprep.subr.mxu0 0.0
      %2351 = vmatpush1.msra.mxu0 0.0
      %2352 = vmatprep.subr.mxu0 0.0
      %2353 = vmatpush1.msra.mxu0 0.0
      %2354 = vmatprep.subr.mxu0 0.0
      %2355 = vmatpush1.msra.mxu0 0.0
      %2356 = vmatprep.subr.mxu0 0.0
      %2357 = vmatpush1.msra.mxu0 0.0
      %2358 = vmatprep.subr.mxu0 0.0
      %2359 = vmatpush1.msra.mxu0 0.0
      %2360 = vmatprep.subr.mxu0 0.0
      %2361 = vmatpush1.msra.mxu0 0.0
      %2362 = vmatprep.subr.mxu0 0.0
      %2363 = vmatpush1.msra.mxu0 0.0
      %2364 = vmatprep.subr.mxu0 0.0
      %2365 = vmatpush1.msra.mxu0 0.0
      %2366 = vmatprep.subr.mxu0 0.0
      %2367 = vmatpush1.msra.mxu0 0.0
      %2368 = vmatprep.mubr.f32.mxu0 0.0
      %2369 = vmatmul.mubr.f32.gmra.mrb[0].mxu0 %v2293
      %v2370 = vpop.f32.mrb[0].mxu0
      %v2371 = vadd.f32 %v2274, %v2370
      %v2372 = vpop.f32.mrb[0].mxu0
      %2373 = vmatprep.mubr.f32.mxu0 0.0
      %2374 = vmatmul.mubr.f32.gmra.mrb[0].mxu0 %v2296
      %v2375 = vpop.f32.mrb[0].mxu0
      %v2376 = vadd.f32 %v2279, %v2375
      %v2377 = vpop.f32.mrb[0].mxu0
      %2378 = vmatprep.mubr.f32.mxu0 0.0
      %2379 = vmatmul.mubr.f32.gmra.mrb[0].mxu0 %v2299
      %v2380 = vpop.f32.mrb[0].mxu0
      %v2381 = vadd.f32 %v2284, %v2380
      %v2382 = vpop.f32.mrb[0].mxu0
      %2383 = vmatprep.mubr.f32.mxu0 0.0
      %2384 = vmatmul.mubr.f32.gmra.mrb[0].mxu0 %v2302
      %v2385 = vpop.f32.mrb[0].mxu0
      %v2386 = vadd.f32 %v2289, %v2385
      %v2387 = vpop.f32.mrb[0].mxu0
      %2388 = vdwg.mxu0
      %v2389 = vrot.slane %v2154, 1
      %v2390 = vrot.slane %v2155, 1
      %v2391 = vrot.slane %v2156, 1
      %v2392 = vrot.slane %v2157, 1
      %v2393 = vsel %vm601, %v2391, %v2392
      %v2394 = vsel %vm601, %v2390, %v2391
      %v2395 = vsel %vm601, %v2389, %v2390
      %v2396 = vsel %vm601, %v2392, %v2389
      %v2397 = vmul.f32 %v2395, %v377
      %v2398 = vmul.f32 %v2394, %v378
      %v2399 = vmul.f32 %v2393, %v379
      %v2400 = vmul.f32 %v2396, %v380
      %v2402 = vsel %vm762, %v2397, 0
      %v2405 = vsel %vm762, %v2398, 0
      %v2408 = vsel %vm762, %v2399, 0
      %v2411 = vsel %vm762, %v2400, 0
      %2413 = vmatprep.subr.mxu0 0.0
      %2414 = vmatpush1.msra.mxu0 %v2174
      %2415 = vmatprep.subr.mxu0 0.0
      %2416 = vmatpush1.msra.mxu0 %v2175
      %2417 = vmatprep.subr.mxu0 0.0
      %2418 = vmatpush1.msra.mxu0 %v2176
      %2419 = vmatprep.subr.mxu0 0.0
      %2420 = vmatpush1.msra.mxu0 %v2177
      %2421 = vmatprep.subr.mxu0 0.0
      %2422 = vmatpush1.msra.mxu0 %v2178
      %2423 = vmatprep.subr.mxu0 0.0
      %2424 = vmatpush1.msra.mxu0 %v2179
      %2425 = vmatprep.subr.mxu0 0.0
      %2426 = vmatpush1.msra.mxu0 %v2180
      %2427 = vmatprep.subr.mxu0 0.0
      %2428 = vmatpush1.msra.mxu0 %v2181
      %2429 = vmatprep.subr.mxu0 0.0
      %2430 = vmatpush1.msra.mxu0 0.0
      %2431 = vmatprep.subr.mxu0 0.0
      %2432 = vmatpush1.msra.mxu0 0.0
      %2433 = vmatprep.subr.mxu0 0.0
      %2434 = vmatpush1.msra.mxu0 0.0
      %2435 = vmatprep.subr.mxu0 0.0
      %2436 = vmatpush1.msra.mxu0 0.0
      %2437 = vmatprep.subr.mxu0 0.0
      %2438 = vmatpush1.msra.mxu0 0.0
      %2439 = vmatprep.subr.mxu0 0.0
      %2440 = vmatpush1.msra.mxu0 0.0
      %2441 = vmatprep.subr.mxu0 0.0
      %2442 = vmatpush1.msra.mxu0 0.0
      %2443 = vmatprep.subr.mxu0 0.0
      %2444 = vmatpush1.msra.mxu0 0.0
      %2445 = vmatprep.subr.mxu0 0.0
      %2446 = vmatpush1.msra.mxu0 0.0
      %2447 = vmatprep.subr.mxu0 0.0
      %2448 = vmatpush1.msra.mxu0 0.0
      %2449 = vmatprep.subr.mxu0 0.0
      %2450 = vmatpush1.msra.mxu0 0.0
      %2451 = vmatprep.subr.mxu0 0.0
      %2452 = vmatpush1.msra.mxu0 0.0
      %2453 = vmatprep.subr.mxu0 0.0
      %2454 = vmatpush1.msra.mxu0 0.0
      %2455 = vmatprep.subr.mxu0 0.0
      %2456 = vmatpush1.msra.mxu0 0.0
      %2457 = vmatprep.subr.mxu0 0.0
      %2458 = vmatpush1.msra.mxu0 0.0
      %2459 = vmatprep.subr.mxu0 0.0
      %2460 = vmatpush1.msra.mxu0 0.0
      %2461 = vmatprep.subr.mxu0 0.0
      %2462 = vmatpush1.msra.mxu0 0.0
      %2463 = vmatprep.subr.mxu0 0.0
      %2464 = vmatpush1.msra.mxu0 0.0
      %2465 = vmatprep.subr.mxu0 0.0
      %2466 = vmatpush1.msra.mxu0 0.0
      %2467 = vmatprep.subr.mxu0 0.0
      %2468 = vmatpush1.msra.mxu0 0.0
      %2469 = vmatprep.subr.mxu0 0.0
      %2470 = vmatpush1.msra.mxu0 0.0
      %2471 = vmatprep.subr.mxu0 0.0
      %2472 = vmatpush1.msra.mxu0 0.0
      %2473 = vmatprep.subr.mxu0 0.0
      %2474 = vmatpush1.msra.mxu0 0.0
      %2475 = vmatprep.subr.mxu0 0.0
      %2476 = vmatpush1.msra.mxu0 0.0
      %2477 = vmatprep.mubr.f32.mxu0 0.0
      %2478 = vmatmul.mubr.f32.gmra.mrb[0].mxu0 %v2402
      %v2479 = vpop.f32.mrb[0].mxu0
      %v2480 = vadd.f32 0.0, %v2479
      %v2481 = vpop.f32.mrb[0].mxu0
      %2482 = vmatprep.mubr.f32.mxu0 0.0
      %2483 = vmatmul.mubr.f32.gmra.mrb[0].mxu0 %v2405
      %v2484 = vpop.f32.mrb[0].mxu0
      %v2485 = vadd.f32 0.0, %v2484
      %v2486 = vpop.f32.mrb[0].mxu0
      %2487 = vmatprep.mubr.f32.mxu0 0.0
      %2488 = vmatmul.mubr.f32.gmra.mrb[0].mxu0 %v2408
      %v2489 = vpop.f32.mrb[0].mxu0
      %v2490 = vadd.f32 0.0, %v2489
      %v2491 = vpop.f32.mrb[0].mxu0
      %2492 = vmatprep.mubr.f32.mxu0 0.0
      %2493 = vmatmul.mubr.f32.gmra.mrb[0].mxu0 %v2411
      %v2494 = vpop.f32.mrb[0].mxu0
      %v2495 = vadd.f32 0.0, %v2494
      %v2496 = vpop.f32.mrb[0].mxu0
      %2497 = vdwg.mxu0
      %v2498 = vadd.f32 %v2371, %v2480
      %v2499 = vadd.f32 %v2376, %v2485
      %v2500 = vadd.f32 %v2381, %v2490
      %v2501 = vadd.f32 %v2386, %v2495
      %v2503 = vlaneseq
      %v2504 = vshrl.u32 %v2503, 7
      %v2505 = vsub.s32 0, %v2504
      %v2506 = vrot.slane %v2182, %v2505
      %v2508 = vadd.f32 %v2498, %v2506
      %v2509 = vadd.f32 %v2499, %v2506
      %v2510 = vadd.f32 %v2500, %v2506
      %v2511 = vadd.f32 %v2501, %v2506
      %v2512 = vxor.u32 %v2508, 2147483648
      %v2513 = vxor.u32 %v2509, 2147483648
      %v2514 = vxor.u32 %v2510, 2147483648
      %v2515 = vxor.u32 %v2511, 2147483648
      %v2516 = vmul.f32 %v2512, 1.442695
      %v2517 = vpow.pop %v2516
      %v2518 = vmul.f32 %v2513, 1.442695
      %v2519 = vpow.pop %v2518
      %v2520 = vmul.f32 %v2514, 1.442695
      %v2521 = vpow.pop %v2520
      %v2522 = vmul.f32 %v2515, 1.442695
      %v2523 = vpow.pop %v2522
      %v2524 = vadd.f32 %v2517, 1.0
      %v2525 = vadd.f32 %v2519, 1.0
      %v2526 = vadd.f32 %v2521, 1.0
      %v2527 = vadd.f32 %v2523, 1.0
      %v2528 = vrcp.pop %v2524
      %v2529 = vmul.f32 1.0, %v2528
      %v2530 = vrcp.pop %v2525
      %v2531 = vmul.f32 1.0, %v2530
      %v2532 = vrcp.pop %v2526
      %v2533 = vmul.f32 1.0, %v2532
      %v2534 = vrcp.pop %v2527
      %v2535 = vmul.f32 1.0, %v2534
      %2536 = vst.msk [vmem:[%s359] sm:$0xff] %vm402, %v2529
      %2537 = vst.msk [vmem:[%s359 + $0x8] sm:$0xff] %vm402, %v2531
      %2538 = vst.msk [vmem:[%s359 + $0x10] sm:$0xff] %vm402, %v2533
      %2539 = vst.msk [vmem:[%s359 + $0x18] sm:$0xff] %vm402, %v2535
      %p2540 = scmp.lt.s32.totalorder %s21, 1
      %s2541 = scalar_select %p2540, %s21, 1
      %s2542 = smul.addr %s2541, 4
      %s2543 = smul.addr %s2542, 8
      %s2544 = scalar_lea.vmem %s10, %s2543
      // Predicated region
      $region61: #{conv1d_autoencoder.1} parent=59 // pred_check
        %p2545 = pneg %p254
      $region62: #{conv1d_autoencoder.1} parent=59 // pred_check_branch
        %2547 = sbr.rel (%p2545) target = $region64
      $region63: #{conv1d_autoencoder.1} parent=59 // pred_region
        _
      $region64: #{conv1d_autoencoder.1} parent=59 // pred_fallthru
        _
    $region60: #{conv1d_autoencoder.1} parent=5 // pred_fallthru
      _
    %p2548 = scmp.le.s32.totalorder 2, %s16
    // Predicated region
    $region65: #{conv1d_autoencoder.1} parent=5 // pred_check
      %p2549 = pneg %p2548
    $region66: #{conv1d_autoencoder.1} parent=5 // pred_check_branch
      %2551 = sbr.rel (%p2549) target = $region68
    $region67: #{conv1d_autoencoder.1} parent=5 // pred_region
      %s2552 = ssub.s32 %s16, 2
      // Predicated region
      $region69: #{conv1d_autoencoder.1} parent=67 // pred_check
        %p2553 = pneg %p260
      $region70: #{conv1d_autoencoder.1} parent=67 // pred_check_branch
        %2555 = sbr.rel (%p2553) target = $region72
      $region71: #{conv1d_autoencoder.1} parent=67 // pred_region
        %p2556 = scmp.lt.s32.totalorder %s22, 1
        %s2557 = scalar_select %p2556, %s22, 1
        %s2558 = smul.addr %s2557, 4
        %s2559 = smul.addr %s2558, 8
        %s2560 = scalar_lea.vmem %s10, %s2559
      $region72: #{conv1d_autoencoder.1} parent=67 // pred_fallthru
        _
    $region68: #{conv1d_autoencoder.1} parent=5 // pred_fallthru
      _
  $region6: #{conv1d_autoencoder.1} parent=0 // loop_footer
    %s20 = sadd.s32 1, %s16
  $region7: #{conv1d_autoencoder.1} parent=0 // loop_footer_branch
    %15 = sbr.rel target = $region3
  $region8: #{conv1d_autoencoder.1} parent=0 // loop_exit
    _

</llo_original>
